<compile_context>
chip_gen: v6e
topology: v6e:2x2x1
jax: 0.10.0
libtpu: 0.0.40
codegen_flags: <defaults>
</compile_context>

<pallas_src>
import jax
import jax.numpy as jnp
from jax.experimental import pallas as pl
from jax.experimental.pallas import tpu as pltpu


def _round_up(a, m):
    return ((a + m - 1) // m) * m


def _leaky_relu(x, slope=0.2):
    return jnp.where(x > 0, x, slope * x)


def disc_mlp_kernel(x_ref,
                    w0_ref, b0_ref,
                    w1_ref, b1_ref,
                    w2_ref, b2_ref,
                    w3_ref, b3_ref,
                    wout_ref,
                    o_ref):
    # ---- Layer 0: K = input_size (tiny) -> VPU outer-product FMA, skip the MXU.
    x = x_ref[...].astype(jnp.float32)            # (in_size, TB), batch on lanes
    w0 = w0_ref[...].astype(jnp.float32)          # (H, in_size), kept f32
    h = b0_ref[...].astype(jnp.float32) + w0[:, 0:1] * x[0:1, :]      # (H, TB)
    for j in range(1, w0.shape[1]):               # in_size is tiny and static
        h = h + w0[:, j:j + 1] * x[j:j + 1, :]
    h = _leaky_relu(h)

    # ---- Hidden layers 1..3: (H,H)@(H,TB) MXU matmuls. Weights arrive pre-cast
    # to bf16 (MXU-native); accumulation is f32; bias add + LeakyReLU stay f32 on
    # the VPU (portable to v5e, which has no bf16 VPU datapath).
    for w_ref, b_ref in ((w1_ref, b1_ref), (w2_ref, b2_ref), (w3_ref, b3_ref)):
        w = w_ref[...]
        h = jnp.dot(w, h.astype(w.dtype), preferred_element_type=jnp.float32)
        h = _leaky_relu(h + b_ref[...].astype(jnp.float32))

    # ---- Output layer (M=1, no bias): keep it OFF the MXU. VPU broadcast-multiply
    # against the (H,1) weight column + sublane reduction -> lane-dense (1, TB).
    wcol = wout_ref[...].astype(jnp.float32)                      # (H, 1)
    logits = jnp.sum(wcol * h, axis=0, keepdims=True)             # (1, TB), f32

    # Exact, numerically stable sigmoid on the EUP: sigmoid(x) = 0.5*(tanh(x/2)+1).
    o_ref[...] = (0.5 * (jnp.tanh(0.5 * logits) + 1.0)).astype(o_ref.dtype)


def _default_tile_b(B):
    """Pick the batch tile: as large as possible (amortize per-step overhead and
    per-layer MXU weight pushes), capped at 8192 (VMEM-safe even on v7x's 64 MiB /
    32 MiB scoped default), but >=2 tiles when there is enough batch so the
    "parallel" grid axis can feed both v7x TensorCores."""
    B_r = _round_up(max(int(B), 1), 128)
    tb = min(8192, B_r)
    if B_r > 128 and B_r // tb < 2:
        tb = _round_up((B_r + 1) // 2, 128)
    return tb


def torch_mlp_discriminator_forward(x, params, *, tile_b=None, use_bf16_matmul=True):
    """x: (B, input_size) float32. params (PyTorch layout):
         w0..w3: (out, in), b0..b3: (out,) or (out,1), wout: (1, hidden).
       Returns sigmoid scores of shape (B, 1), float32.

       use_bf16_matmul=True (default): hidden-layer weights + activations are cast
       to bf16 at the MXU (f32 accumulation). Scores near the 0.5 decision boundary
       can shift by O(1e-2) vs pure f32 -- acceptable for a GAN discriminator."""
    B, in_size = x.shape
    H = params["w0"].shape[0]
    f32 = jnp.float32
    mat_dt = jnp.bfloat16 if use_bf16_matmul else f32

    # Weight preparation (host side, free): PyTorch layouts preserved.
    w0 = params["w0"].astype(f32)                                   # (H, in) VPU layer
    biases = [params[f"b{i}"].astype(f32).reshape(H, 1) for i in range(4)]
    w_hidden = [params[f"w{i}"].astype(mat_dt) for i in (1, 2, 3)]  # MXU operands
    wout_col = params["wout"].astype(f32).reshape(H, 1)             # (H,1), VPU epilogue

    # Batch tiling: lane-aligned, sweepable, clamped to [128, 8192].
    if tile_b is None:
        tile_b = _default_tile_b(B)
    tile_b = int(max(128, min(8192, _round_up(int(tile_b), 128))))
    B_pad = _round_up(max(B, 1), tile_b)
    grid = (B_pad // tile_b,)

    # Pad batch and transpose so the batch maps to the lane (fast) axis.
    x_t = jnp.pad(x.astype(f32), ((0, B_pad - B), (0, 0))).T        # (in_size, B_pad)

    def const2d(a):
        # Constant index map -> block stays VMEM-resident across all batch tiles.
        return pl.BlockSpec(a.shape, lambda i: (0, 0))

    in_specs = [
        pl.BlockSpec((in_size, tile_b), lambda i: (0, i)),
        const2d(w0), const2d(biases[0]),
        const2d(w_hidden[0]), const2d(biases[1]),
        const2d(w_hidden[1]), const2d(biases[2]),
        const2d(w_hidden[2]), const2d(biases[3]),
        const2d(wout_col),
    ]
    out_spec = pl.BlockSpec((1, tile_b), lambda i: (0, i))

    operands = [x_t, w0, biases[0], w_hidden[0], biases[1], w_hidden[1], biases[2],
                w_hidden[2], biases[3], wout_col]
    bytes_accessed = sum(int(a.size) * a.dtype.itemsize for a in operands) + B_pad * 4
    cost = pl.CostEstimate(
        flops=2 * B_pad * (in_size * H + 3 * H * H + H),
        transcendentals=B_pad,
        bytes_accessed=int(bytes_accessed),
    )

    out = pl.pallas_call(
        disc_mlp_kernel,
        out_shape=jax.ShapeDtypeStruct((1, B_pad), jnp.float32),
        grid=grid,
        in_specs=in_specs,
        out_specs=out_spec,
        compiler_params=pltpu.CompilerParams(
            dimension_semantics=("parallel",)),   # batch tiles shard across v7x's 2 TCs
        cost_estimate=cost,
    )(*operands)

    return out[:, :B].T  # (B, 1)


def init_params(key, input_size=2, hidden=128, n_layers=4, out_size=1):
    """PyTorch nn.Linear default init: W, b ~ U(-1/sqrt(fan_in), 1/sqrt(fan_in)).
       Weights stored PyTorch-style as (out, in); biases as (out,)."""
    params = {}
    sizes = [input_size] + [hidden] * n_layers
    keys = jax.random.split(key, 2 * n_layers + 1)
    for i in range(n_layers):
        bound = 1.0 / (sizes[i] ** 0.5)
        params[f"w{i}"] = jax.random.uniform(
            keys[2 * i], (sizes[i + 1], sizes[i]), jnp.float32, -bound, bound)
        params[f"b{i}"] = jax.random.uniform(
            keys[2 * i + 1], (sizes[i + 1],), jnp.float32, -bound, bound)
    bound = 1.0 / (sizes[-1] ** 0.5)
    params["wout"] = jax.random.uniform(
        keys[-1], (out_size, sizes[-1]), jnp.float32, -bound, bound)
    return params


def reference_forward(x, params, *, matmul_dtype=jnp.float32):
    """Pure-JAX reference (batch-major). With matmul_dtype=jnp.bfloat16 it emulates
    the kernel's bf16 MXU operands (f32 accumulation) for a tight comparison; the
    f32 path uses Precision.HIGHEST so the reference itself is accurate on TPU."""
    hp = jax.lax.Precision.HIGHEST
    h = x.astype(jnp.float32)
    for i in range(4):
        w = params[f"w{i}"].astype(jnp.float32)
        bias = params[f"b{i}"].astype(jnp.float32).reshape(-1)
        if i == 0 or matmul_dtype == jnp.float32:
            h = jnp.dot(h, w.T, precision=hp) + bias
        else:
            h = jnp.dot(h.astype(matmul_dtype), w.T.astype(matmul_dtype),
                        preferred_element_type=jnp.float32) + bias
        h = jnp.where(h > 0, h, 0.2 * h)
    wout = params["wout"].astype(jnp.float32)
    logits = jnp.dot(h, wout.T, precision=hp)
    return jax.nn.sigmoid(logits)


if __name__ == "__main__":
    key = jax.random.PRNGKey(0)
    k_param, k_x1, k_x2 = jax.random.split(key, 3)

    INPUT_SIZE, HIDDEN = 2, 128
    params = init_params(k_param, input_size=INPUT_SIZE, hidden=HIDDEN,
                         n_layers=4, out_size=1)

    # --- Single batch tile: B=64 -> one 128-wide tile, grid=(1,). ---
    B1 = 64
    x1 = jax.random.normal(k_x1, (B1, INPUT_SIZE), dtype=jnp.float32)
    out1 = jax.block_until_ready(torch_mlp_discriminator_forward(x1, params))
    ref1_bf16 = reference_forward(x1, params, matmul_dtype=jnp.bfloat16)
    ref1_f32 = reference_forward(x1, params)
    assert out1.shape == (B1, 1)
    assert jnp.allclose(out1, ref1_bf16, atol=5e-3, rtol=0.0), \
        f"single-tile max|err| vs bf16 ref = {float(jnp.max(jnp.abs(out1 - ref1_bf16))):.2e}"
    assert jnp.allclose(out1, ref1_f32, atol=3e-2, rtol=0.0), \
        f"single-tile max|err| vs f32 ref = {float(jnp.max(jnp.abs(out1 - ref1_f32))):.2e}"

    # --- Multi-tile grid: B=300. Default tiling -> 2 tiles of 256 (feeds both v7x
    #     TCs); explicit tile_b=128 -> 3-step grid (the previously failing config). ---
    B2 = 300
    x2 = jax.random.normal(k_x2, (B2, INPUT_SIZE), dtype=jnp.float32)
    ref2_bf16 = reference_forward(x2, params, matmul_dtype=jnp.bfloat16)
    ref2_f32 = reference_forward(x2, params)
    for tb in (None, 128):
        out2 = jax.block_until_ready(
            torch_mlp_discriminator_forward(x2, params, tile_b=tb))
        assert out2.shape == (B2, 1)
        assert jnp.allclose(out2, ref2_bf16, atol=5e-3, rtol=0.0), \
            f"tile_b={tb}: max|err| vs bf16 ref = {float(jnp.max(jnp.abs(out2 - ref2_bf16))):.2e}"
        assert jnp.allclose(out2, ref2_f32, atol=3e-2, rtol=0.0), \
            f"tile_b={tb}: max|err| vs f32 ref = {float(jnp.max(jnp.abs(out2 - ref2_f32))):.2e}"

    # --- f32-matmul path (use_bf16_matmul=False), loose tolerance (precision of the
    #     in-kernel f32 dot is hardware/compiler dependent). ---
    out3 = jax.block_until_ready(
        torch_mlp_discriminator_forward(x1, params, use_bf16_matmul=False))
    assert out3.shape == (B1, 1)
    assert jnp.allclose(out3, ref1_f32, atol=3e-2, rtol=0.0)

    print("KERNEL_OK")
</pallas_src>

<mosaic_0001>
module attributes {stable_mosaic.version = 11 : i64} {
  func.func @disc_mlp_kernel(%arg0: i32, %arg1: memref<2x128xf32, #tpu.memory_space<vmem>>, %arg2: memref<128x2xf32, #tpu.memory_space<vmem>>, %arg3: memref<128x1xf32, #tpu.memory_space<vmem>>, %arg4: memref<128x128xbf16, #tpu.memory_space<vmem>>, %arg5: memref<128x1xf32, #tpu.memory_space<vmem>>, %arg6: memref<128x128xbf16, #tpu.memory_space<vmem>>, %arg7: memref<128x1xf32, #tpu.memory_space<vmem>>, %arg8: memref<128x128xbf16, #tpu.memory_space<vmem>>, %arg9: memref<128x1xf32, #tpu.memory_space<vmem>>, %arg10: memref<128x1xf32, #tpu.memory_space<vmem>>, %arg11: memref<1x128xf32, #tpu.memory_space<vmem>>) attributes {dimension_semantics = [#tpu.dimension_semantics<parallel>], iteration_bounds = array<i64: 1>, scalar_prefetch = 0 : i64, scratch_operands = 0 : i64, tpu.core_type = #tpu.core_type<tc>, window_params = [{transform_indices = @transform_0, window_bounds = array<i64: 2, 128>}, {pipeline_mode = #tpu.pipeline_mode<synchronous>, transform_indices = @transform_1, window_bounds = array<i64: 128, 2>}, {pipeline_mode = #tpu.pipeline_mode<synchronous>, transform_indices = @transform_2, window_bounds = array<i64: 128, 1>}, {pipeline_mode = #tpu.pipeline_mode<synchronous>, transform_indices = @transform_3, window_bounds = array<i64: 128, 128>}, {pipeline_mode = #tpu.pipeline_mode<synchronous>, transform_indices = @transform_4, window_bounds = array<i64: 128, 1>}, {pipeline_mode = #tpu.pipeline_mode<synchronous>, transform_indices = @transform_5, window_bounds = array<i64: 128, 128>}, {pipeline_mode = #tpu.pipeline_mode<synchronous>, transform_indices = @transform_6, window_bounds = array<i64: 128, 1>}, {pipeline_mode = #tpu.pipeline_mode<synchronous>, transform_indices = @transform_7, window_bounds = array<i64: 128, 128>}, {pipeline_mode = #tpu.pipeline_mode<synchronous>, transform_indices = @transform_8, window_bounds = array<i64: 128, 1>}, {pipeline_mode = #tpu.pipeline_mode<synchronous>, transform_indices = @transform_9, window_bounds = array<i64: 128, 1>}, {transform_indices = @transform_10, window_bounds = array<i64: 1, 128>}]} {
    %c0 = arith.constant 0 : index
    %c0_0 = arith.constant 0 : index
    %0 = vector.load %arg1[%c0, %c0_0] : memref<2x128xf32, #tpu.memory_space<vmem>>, vector<2x128xf32>
    %c0_1 = arith.constant 0 : index
    %c0_2 = arith.constant 0 : index
    %1 = vector.load %arg2[%c0_1, %c0_2] : memref<128x2xf32, #tpu.memory_space<vmem>>, vector<128x2xf32>
    %c0_3 = arith.constant 0 : index
    %c0_4 = arith.constant 0 : index
    %2 = vector.load %arg3[%c0_3, %c0_4] : memref<128x1xf32, #tpu.memory_space<vmem>>, vector<128x1xf32>
    %3 = vector.extract_strided_slice %1 {offsets = [0, 0], sizes = [128, 1], strides = [1, 1]} : vector<128x2xf32> to vector<128x1xf32>
    %4 = vector.extract_strided_slice %0 {offsets = [0, 0], sizes = [1, 128], strides = [1, 1]} : vector<2x128xf32> to vector<1x128xf32>
    %5 = vector.broadcast %3 : vector<128x1xf32> to vector<128x128xf32>
    %6 = vector.broadcast %4 : vector<1x128xf32> to vector<128x128xf32>
    %7 = arith.mulf %5, %6 : vector<128x128xf32>
    %8 = vector.broadcast %2 : vector<128x1xf32> to vector<128x128xf32>
    %9 = arith.addf %8, %7 : vector<128x128xf32>
    %10 = vector.extract_strided_slice %1 {offsets = [0, 1], sizes = [128, 1], strides = [1, 1]} : vector<128x2xf32> to vector<128x1xf32>
    %11 = vector.extract_strided_slice %0 {offsets = [1, 0], sizes = [1, 128], strides = [1, 1]} : vector<2x128xf32> to vector<1x128xf32>
    %12 = vector.broadcast %10 : vector<128x1xf32> to vector<128x128xf32>
    %13 = vector.broadcast %11 : vector<1x128xf32> to vector<128x128xf32>
    %14 = arith.mulf %12, %13 : vector<128x128xf32>
    %15 = arith.addf %9, %14 : vector<128x128xf32>
    %cst = arith.constant 0.000000e+00 : f32
    %16 = vector.broadcast %cst : f32 to vector<128x128xf32>
    %17 = arith.cmpf ogt, %15, %16 : vector<128x128xf32>
    %cst_5 = arith.constant 2.000000e-01 : f32
    %18 = vector.broadcast %cst_5 : f32 to vector<128x128xf32>
    %19 = arith.mulf %18, %15 : vector<128x128xf32>
    %20 = arith.select %17, %15, %19 : vector<128x128xi1>, vector<128x128xf32>
    %c0_6 = arith.constant 0 : index
    %c0_7 = arith.constant 0 : index
    %21 = vector.load %arg4[%c0_6, %c0_7] : memref<128x128xbf16, #tpu.memory_space<vmem>>, vector<128x128xbf16>
    %22 = arith.truncf %20 : vector<128x128xf32> to vector<128x128xbf16>
    %cst_8 = arith.constant dense<0.000000e+00> : vector<128x128xf32>
    %23 = tpu.matmul %21, %22, %cst_8 {dimension_numbers = #tpu.dot_dimension_numbers<[1], [0], [0], [1], [0, 0, 1, 1], [], []>} : vector<128x128xbf16>, vector<128x128xbf16>, vector<128x128xf32> -> vector<128x128xf32>
    %c0_9 = arith.constant 0 : index
    %c0_10 = arith.constant 0 : index
    %24 = vector.load %arg5[%c0_9, %c0_10] : memref<128x1xf32, #tpu.memory_space<vmem>>, vector<128x1xf32>
    %25 = vector.broadcast %24 : vector<128x1xf32> to vector<128x128xf32>
    %26 = arith.addf %23, %25 : vector<128x128xf32>
    %cst_11 = arith.constant 0.000000e+00 : f32
    %27 = vector.broadcast %cst_11 : f32 to vector<128x128xf32>
    %28 = arith.cmpf ogt, %26, %27 : vector<128x128xf32>
    %cst_12 = arith.constant 2.000000e-01 : f32
    %29 = vector.broadcast %cst_12 : f32 to vector<128x128xf32>
    %30 = arith.mulf %29, %26 : vector<128x128xf32>
    %31 = arith.select %28, %26, %30 : vector<128x128xi1>, vector<128x128xf32>
    %c0_13 = arith.constant 0 : index
    %c0_14 = arith.constant 0 : index
    %32 = vector.load %arg6[%c0_13, %c0_14] : memref<128x128xbf16, #tpu.memory_space<vmem>>, vector<128x128xbf16>
    %33 = arith.truncf %31 : vector<128x128xf32> to vector<128x128xbf16>
    %cst_15 = arith.constant dense<0.000000e+00> : vector<128x128xf32>
    %34 = tpu.matmul %32, %33, %cst_15 {dimension_numbers = #tpu.dot_dimension_numbers<[1], [0], [0], [1], [0, 0, 1, 1], [], []>} : vector<128x128xbf16>, vector<128x128xbf16>, vector<128x128xf32> -> vector<128x128xf32>
    %c0_16 = arith.constant 0 : index
    %c0_17 = arith.constant 0 : index
    %35 = vector.load %arg7[%c0_16, %c0_17] : memref<128x1xf32, #tpu.memory_space<vmem>>, vector<128x1xf32>
    %36 = vector.broadcast %35 : vector<128x1xf32> to vector<128x128xf32>
    %37 = arith.addf %34, %36 : vector<128x128xf32>
    %cst_18 = arith.constant 0.000000e+00 : f32
    %38 = vector.broadcast %cst_18 : f32 to vector<128x128xf32>
    %39 = arith.cmpf ogt, %37, %38 : vector<128x128xf32>
    %cst_19 = arith.constant 2.000000e-01 : f32
    %40 = vector.broadcast %cst_19 : f32 to vector<128x128xf32>
    %41 = arith.mulf %40, %37 : vector<128x128xf32>
    %42 = arith.select %39, %37, %41 : vector<128x128xi1>, vector<128x128xf32>
    %c0_20 = arith.constant 0 : index
    %c0_21 = arith.constant 0 : index
    %43 = vector.load %arg8[%c0_20, %c0_21] : memref<128x128xbf16, #tpu.memory_space<vmem>>, vector<128x128xbf16>
    %44 = arith.truncf %42 : vector<128x128xf32> to vector<128x128xbf16>
    %cst_22 = arith.constant dense<0.000000e+00> : vector<128x128xf32>
    %45 = tpu.matmul %43, %44, %cst_22 {dimension_numbers = #tpu.dot_dimension_numbers<[1], [0], [0], [1], [0, 0, 1, 1], [], []>} : vector<128x128xbf16>, vector<128x128xbf16>, vector<128x128xf32> -> vector<128x128xf32>
    %c0_23 = arith.constant 0 : index
    %c0_24 = arith.constant 0 : index
    %46 = vector.load %arg9[%c0_23, %c0_24] : memref<128x1xf32, #tpu.memory_space<vmem>>, vector<128x1xf32>
    %47 = vector.broadcast %46 : vector<128x1xf32> to vector<128x128xf32>
    %48 = arith.addf %45, %47 : vector<128x128xf32>
    %cst_25 = arith.constant 0.000000e+00 : f32
    %49 = vector.broadcast %cst_25 : f32 to vector<128x128xf32>
    %50 = arith.cmpf ogt, %48, %49 : vector<128x128xf32>
    %cst_26 = arith.constant 2.000000e-01 : f32
    %51 = vector.broadcast %cst_26 : f32 to vector<128x128xf32>
    %52 = arith.mulf %51, %48 : vector<128x128xf32>
    %53 = arith.select %50, %48, %52 : vector<128x128xi1>, vector<128x128xf32>
    %c0_27 = arith.constant 0 : index
    %c0_28 = arith.constant 0 : index
    %54 = vector.load %arg10[%c0_27, %c0_28] : memref<128x1xf32, #tpu.memory_space<vmem>>, vector<128x1xf32>
    %55 = vector.broadcast %54 : vector<128x1xf32> to vector<128x128xf32>
    %56 = arith.mulf %55, %53 : vector<128x128xf32>
    %cst_29 = arith.constant dense<0.000000e+00> : vector<128xf32>
    %57 = vector.multi_reduction <add>, %56, %cst_29 [0] : vector<128x128xf32> to vector<128xf32>
    %58 = vector.shape_cast %57 : vector<128xf32> to vector<1x128xf32>
    %cst_30 = arith.constant 5.000000e-01 : f32
    %59 = vector.broadcast %cst_30 : f32 to vector<1x128xf32>
    %60 = arith.mulf %59, %58 : vector<1x128xf32>
    %61 = math.tanh %60 : vector<1x128xf32>
    %cst_31 = arith.constant 1.000000e+00 : f32
    %62 = vector.broadcast %cst_31 : f32 to vector<1x128xf32>
    %63 = arith.addf %61, %62 : vector<1x128xf32>
    %cst_32 = arith.constant 5.000000e-01 : f32
    %64 = vector.broadcast %cst_32 : f32 to vector<1x128xf32>
    %65 = arith.mulf %64, %63 : vector<1x128xf32>
    %c0_33 = arith.constant 0 : index
    %c0_34 = arith.constant 0 : index
    %66 = vector.load %arg11[%c0_33, %c0_34] : memref<1x128xf32, #tpu.memory_space<vmem>>, vector<1x128xf32>
    tpu.vector_store %arg11[%c0_33, %c0_34], %65 {strides = array<i32>} : memref<1x128xf32, #tpu.memory_space<vmem>>, vector<1x128xf32>,
    return
  }
  func.func @transform_0(%arg0: i32) -> (i32, i32) {
    %c0_i32 = arith.constant 0 : i32
    %c0_i32_0 = arith.constant 0 : i32
    return %c0_i32, %arg0 : i32, i32
  }
  func.func @transform_1(%arg0: i32) -> (i32, i32) {
    %c0_i32 = arith.constant 0 : i32
    %c0_i32_0 = arith.constant 0 : i32
    %c0_i32_1 = arith.constant 0 : i32
    return %c0_i32, %c0_i32_0 : i32, i32
  }
  func.func @transform_2(%arg0: i32) -> (i32, i32) {
    %c0_i32 = arith.constant 0 : i32
    %c0_i32_0 = arith.constant 0 : i32
    %c0_i32_1 = arith.constant 0 : i32
    return %c0_i32, %c0_i32_0 : i32, i32
  }
  func.func @transform_3(%arg0: i32) -> (i32, i32) {
    %c0_i32 = arith.constant 0 : i32
    %c0_i32_0 = arith.constant 0 : i32
    %c0_i32_1 = arith.constant 0 : i32
    return %c0_i32, %c0_i32_0 : i32, i32
  }
  func.func @transform_4(%arg0: i32) -> (i32, i32) {
    %c0_i32 = arith.constant 0 : i32
    %c0_i32_0 = arith.constant 0 : i32
    %c0_i32_1 = arith.constant 0 : i32
    return %c0_i32, %c0_i32_0 : i32, i32
  }
  func.func @transform_5(%arg0: i32) -> (i32, i32) {
    %c0_i32 = arith.constant 0 : i32
    %c0_i32_0 = arith.constant 0 : i32
    %c0_i32_1 = arith.constant 0 : i32
    return %c0_i32, %c0_i32_0 : i32, i32
  }
  func.func @transform_6(%arg0: i32) -> (i32, i32) {
    %c0_i32 = arith.constant 0 : i32
    %c0_i32_0 = arith.constant 0 : i32
    %c0_i32_1 = arith.constant 0 : i32
    return %c0_i32, %c0_i32_0 : i32, i32
  }
  func.func @transform_7(%arg0: i32) -> (i32, i32) {
    %c0_i32 = arith.constant 0 : i32
    %c0_i32_0 = arith.constant 0 : i32
    %c0_i32_1 = arith.constant 0 : i32
    return %c0_i32, %c0_i32_0 : i32, i32
  }
  func.func @transform_8(%arg0: i32) -> (i32, i32) {
    %c0_i32 = arith.constant 0 : i32
    %c0_i32_0 = arith.constant 0 : i32
    %c0_i32_1 = arith.constant 0 : i32
    return %c0_i32, %c0_i32_0 : i32, i32
  }
  func.func @transform_9(%arg0: i32) -> (i32, i32) {
    %c0_i32 = arith.constant 0 : i32
    %c0_i32_0 = arith.constant 0 : i32
    %c0_i32_1 = arith.constant 0 : i32
    return %c0_i32, %c0_i32_0 : i32, i32
  }
  func.func @transform_10(%arg0: i32) -> (i32, i32) {
    %c0_i32 = arith.constant 0 : i32
    %c0_i32_0 = arith.constant 0 : i32
    return %c0_i32, %arg0 : i32, i32
  }
}

</mosaic_0001>

<llo_original>
// kernel: tpu_custom_call.1
$region0: #{tpu_custom_call.1}
  #allocation0 [shape = 'u32[]', space=smem, size = 0x4, offset = 0x4, fixed_abs, tag = 'smem constant byte address 0x4 - core index']
  #allocation1 [shape = 'u32[144,128]{1,0:T(1,128)}', space=vmem, size = 0x12000, scoped, tag = 'internal scratch']
  %s0 = inlined_call_operand.vmem [shape: f32[2,128], index: 0, kind: input, shape index: {}]
  %s1 = inlined_call_operand.vmem [shape: f32[128,2], index: 1, kind: input, shape index: {}]
  %s2 = inlined_call_operand.vmem [shape: f32[128,1], index: 2, kind: input, shape index: {}]
  %s3 = inlined_call_operand.vmem [shape: bf16[128,128], index: 3, kind: input, shape index: {}]
  %s4 = inlined_call_operand.vmem [shape: f32[128,1], index: 4, kind: input, shape index: {}]
  %s5 = inlined_call_operand.vmem [shape: bf16[128,128], index: 5, kind: input, shape index: {}]
  %s6 = inlined_call_operand.vmem [shape: f32[128,1], index: 6, kind: input, shape index: {}]
  %s7 = inlined_call_operand.vmem [shape: bf16[128,128], index: 7, kind: input, shape index: {}]
  %s8 = inlined_call_operand.vmem [shape: f32[128,1], index: 8, kind: input, shape index: {}]
  %s9 = inlined_call_operand.vmem [shape: f32[128,1], index: 9, kind: input, shape index: {}]
  %s10 = inlined_call_operand.hbm [shape: f32[1,128], index: 10, kind: output, shape index: {}]
  %s11 = sld [smem:[#allocation0]]
  $region50: #{tpu_custom_call.1} parent=0
    _
  %s13 = ssub.s32 1, %s11
  %s14 = scalar_select 0, %s13, %s11
  $region1: #{tpu_custom_call.1} parent=0
    #allocation2 [shape = 'u8[512]{0}', space=vmem, size = 0x400, scoped, tag = 'output window, operand 0, single buffered']
    #allocation3 [shape = 's32[1]{0}', space=sflag, size = 0x4, scoped, tag = 'scoped memory for tpu_custom_call.1']
    %15 = vsyncpa [#allocation3], 0
    // Predicated region
    $region2: #{tpu_custom_call.1} parent=1 // pred_check
      _
    $region3: #{tpu_custom_call.1} parent=1 // pred_check_branch
      %17 = sbr.rel (0) target = $region5
    $region4: #{tpu_custom_call.1} parent=1 // pred_region
      _
    $region5: #{tpu_custom_call.1} parent=1 // pred_fallthru
      _
    // Predicated region
    $region6: #{tpu_custom_call.1} parent=1 // pred_check
      _
    $region7: #{tpu_custom_call.1} parent=1 // pred_check_branch
      %19 = sbr.rel (0) target = $region9
    $region8: #{tpu_custom_call.1} parent=1 // pred_region
      _
    $region9: #{tpu_custom_call.1} parent=1 // pred_fallthru
      _
    // Predicated region
    $region10: #{tpu_custom_call.1} parent=1 // pred_check
      _
    $region11: #{tpu_custom_call.1} parent=1 // pred_check_branch
      %21 = sbr.rel (0) target = $region13
    $region12: #{tpu_custom_call.1} parent=1 // pred_region
      _
    $region13: #{tpu_custom_call.1} parent=1 // pred_fallthru
      _
    // Predicated region
    $region14: #{tpu_custom_call.1} parent=1 // pred_check
      _
    $region15: #{tpu_custom_call.1} parent=1 // pred_check_branch
      %23 = sbr.rel (0) target = $region17
    $region16: #{tpu_custom_call.1} parent=1 // pred_region
      _
    $region17: #{tpu_custom_call.1} parent=1 // pred_fallthru
      _
    // Predicated region
    $region18: #{tpu_custom_call.1} parent=1 // pred_check
      _
    $region19: #{tpu_custom_call.1} parent=1 // pred_check_branch
      %25 = sbr.rel (0) target = $region21
    $region20: #{tpu_custom_call.1} parent=1 // pred_region
      _
    $region21: #{tpu_custom_call.1} parent=1 // pred_fallthru
      _
    // Predicated region
    $region22: #{tpu_custom_call.1} parent=1 // pred_check
      _
    $region23: #{tpu_custom_call.1} parent=1 // pred_check_branch
      %27 = sbr.rel (0) target = $region25
    $region24: #{tpu_custom_call.1} parent=1 // pred_region
      _
    $region25: #{tpu_custom_call.1} parent=1 // pred_fallthru
      _
    // Predicated region
    $region26: #{tpu_custom_call.1} parent=1 // pred_check
      _
    $region27: #{tpu_custom_call.1} parent=1 // pred_check_branch
      %29 = sbr.rel (0) target = $region29
    $region28: #{tpu_custom_call.1} parent=1 // pred_region
      _
    $region29: #{tpu_custom_call.1} parent=1 // pred_fallthru
      _
    // Predicated region
    $region30: #{tpu_custom_call.1} parent=1 // pred_check
      _
    $region31: #{tpu_custom_call.1} parent=1 // pred_check_branch
      %31 = sbr.rel (0) target = $region33
    $region32: #{tpu_custom_call.1} parent=1 // pred_region
      _
    $region33: #{tpu_custom_call.1} parent=1 // pred_fallthru
      _
    // Predicated region
    $region34: #{tpu_custom_call.1} parent=1 // pred_check
      _
    $region35: #{tpu_custom_call.1} parent=1 // pred_check_branch
      %33 = sbr.rel (0) target = $region37
    $region36: #{tpu_custom_call.1} parent=1 // pred_region
      _
    $region37: #{tpu_custom_call.1} parent=1 // pred_fallthru
      _
    // Predicated region
    $region38: #{tpu_custom_call.1} parent=1 // pred_check
      _
    $region39: #{tpu_custom_call.1} parent=1 // pred_check_branch
      %35 = sbr.rel (0) target = $region41
    $region40: #{tpu_custom_call.1} parent=1 // pred_region
      _
    $region41: #{tpu_custom_call.1} parent=1 // pred_fallthru
      _
    %v37 = vld [vmem:[%s0] sm:$0x3]
    %v38 = vld [vmem:[%s1] sm:$0xff]
    %v39 = vld [vmem:[%s1 + $0x8] sm:$0xff]
    %v40 = vld [vmem:[%s1 + $0x10] sm:$0xff]
    %v41 = vld [vmem:[%s1 + $0x18] sm:$0xff]
    %v42 = vld [vmem:[%s1 + $0x20] sm:$0xff]
    %v43 = vld [vmem:[%s1 + $0x28] sm:$0xff]
    %v44 = vld [vmem:[%s1 + $0x30] sm:$0xff]
    %v45 = vld [vmem:[%s1 + $0x38] sm:$0xff]
    %v46 = vld [vmem:[%s1 + $0x40] sm:$0xff]
    %v47 = vld [vmem:[%s1 + $0x48] sm:$0xff]
    %v48 = vld [vmem:[%s1 + $0x50] sm:$0xff]
    %v49 = vld [vmem:[%s1 + $0x58] sm:$0xff]
    %v50 = vld [vmem:[%s1 + $0x60] sm:$0xff]
    %v51 = vld [vmem:[%s1 + $0x68] sm:$0xff]
    %v52 = vld [vmem:[%s1 + $0x70] sm:$0xff]
    %v53 = vld [vmem:[%s1 + $0x78] sm:$0xff]
    %v54 = vld [vmem:[%s2] sm:$0xff]
    %v55 = vld [vmem:[%s2 + $0x8] sm:$0xff]
    %v56 = vld [vmem:[%s2 + $0x10] sm:$0xff]
    %v57 = vld [vmem:[%s2 + $0x18] sm:$0xff]
    %v58 = vld [vmem:[%s2 + $0x20] sm:$0xff]
    %v59 = vld [vmem:[%s2 + $0x28] sm:$0xff]
    %v60 = vld [vmem:[%s2 + $0x30] sm:$0xff]
    %v61 = vld [vmem:[%s2 + $0x38] sm:$0xff]
    %v62 = vld [vmem:[%s2 + $0x40] sm:$0xff]
    %v63 = vld [vmem:[%s2 + $0x48] sm:$0xff]
    %v64 = vld [vmem:[%s2 + $0x50] sm:$0xff]
    %v65 = vld [vmem:[%s2 + $0x58] sm:$0xff]
    %v66 = vld [vmem:[%s2 + $0x60] sm:$0xff]
    %v67 = vld [vmem:[%s2 + $0x68] sm:$0xff]
    %v68 = vld [vmem:[%s2 + $0x70] sm:$0xff]
    %v69 = vld [vmem:[%s2 + $0x78] sm:$0xff]
    %71 = vset.pattern.permute.xlu0 0
    %72 = vperm.xlu0 %71, %v38
    %v73 = vpop.permute.xlu0 %72
    %76 = vset.pattern.permute.xlu0 0
    %77 = vperm.xlu0 %76, %v39
    %v78 = vpop.permute.xlu0 %77
    %81 = vset.pattern.permute.xlu0 0
    %82 = vperm.xlu0 %81, %v40
    %v83 = vpop.permute.xlu0 %82
    %86 = vset.pattern.permute.xlu0 0
    %87 = vperm.xlu0 %86, %v41
    %v88 = vpop.permute.xlu0 %87
    %91 = vset.pattern.permute.xlu0 0
    %92 = vperm.xlu0 %91, %v42
    %v93 = vpop.permute.xlu0 %92
    %96 = vset.pattern.permute.xlu0 0
    %97 = vperm.xlu0 %96, %v43
    %v98 = vpop.permute.xlu0 %97
    %101 = vset.pattern.permute.xlu0 0
    %102 = vperm.xlu0 %101, %v44
    %v103 = vpop.permute.xlu0 %102
    %106 = vset.pattern.permute.xlu0 0
    %107 = vperm.xlu0 %106, %v45
    %v108 = vpop.permute.xlu0 %107
    %111 = vset.pattern.permute.xlu0 0
    %112 = vperm.xlu0 %111, %v46
    %v113 = vpop.permute.xlu0 %112
    %116 = vset.pattern.permute.xlu0 0
    %117 = vperm.xlu0 %116, %v47
    %v118 = vpop.permute.xlu0 %117
    %121 = vset.pattern.permute.xlu0 0
    %122 = vperm.xlu0 %121, %v48
    %v123 = vpop.permute.xlu0 %122
    %126 = vset.pattern.permute.xlu0 0
    %127 = vperm.xlu0 %126, %v49
    %v128 = vpop.permute.xlu0 %127
    %131 = vset.pattern.permute.xlu0 0
    %132 = vperm.xlu0 %131, %v50
    %v133 = vpop.permute.xlu0 %132
    %136 = vset.pattern.permute.xlu0 0
    %137 = vperm.xlu0 %136, %v51
    %v138 = vpop.permute.xlu0 %137
    %141 = vset.pattern.permute.xlu0 0
    %142 = vperm.xlu0 %141, %v52
    %v143 = vpop.permute.xlu0 %142
    %146 = vset.pattern.permute.xlu0 0
    %147 = vperm.xlu0 %146, %v53
    %v148 = vpop.permute.xlu0 %147
    %v150 = vlaneseq
    %v151 = vshrl.u32 %v150, 7
    %v152 = vsub.s32 0, %v151
    %v153 = vrot.slane %v37, %v152
    %v154 = vmul.f32 %v73, %v153
    %v155 = vmul.f32 %v78, %v153
    %v156 = vmul.f32 %v83, %v153
    %v157 = vmul.f32 %v88, %v153
    %v158 = vmul.f32 %v93, %v153
    %v159 = vmul.f32 %v98, %v153
    %v160 = vmul.f32 %v103, %v153
    %v161 = vmul.f32 %v108, %v153
    %v162 = vmul.f32 %v113, %v153
    %v163 = vmul.f32 %v118, %v153
    %v164 = vmul.f32 %v123, %v153
    %v165 = vmul.f32 %v128, %v153
    %v166 = vmul.f32 %v133, %v153
    %v167 = vmul.f32 %v138, %v153
    %v168 = vmul.f32 %v143, %v153
    %v169 = vmul.f32 %v148, %v153
    %171 = vset.pattern.permute.xlu0 0
    %172 = vperm.xlu0 %171, %v54
    %v173 = vpop.permute.xlu0 %172
    %176 = vset.pattern.permute.xlu0 0
    %177 = vperm.xlu0 %176, %v55
    %v178 = vpop.permute.xlu0 %177
    %181 = vset.pattern.permute.xlu0 0
    %182 = vperm.xlu0 %181, %v56
    %v183 = vpop.permute.xlu0 %182
    %186 = vset.pattern.permute.xlu0 0
    %187 = vperm.xlu0 %186, %v57
    %v188 = vpop.permute.xlu0 %187
    %191 = vset.pattern.permute.xlu0 0
    %192 = vperm.xlu0 %191, %v58
    %v193 = vpop.permute.xlu0 %192
    %196 = vset.pattern.permute.xlu0 0
    %197 = vperm.xlu0 %196, %v59
    %v198 = vpop.permute.xlu0 %197
    %201 = vset.pattern.permute.xlu0 0
    %202 = vperm.xlu0 %201, %v60
    %v203 = vpop.permute.xlu0 %202
    %206 = vset.pattern.permute.xlu0 0
    %207 = vperm.xlu0 %206, %v61
    %v208 = vpop.permute.xlu0 %207
    %211 = vset.pattern.permute.xlu0 0
    %212 = vperm.xlu0 %211, %v62
    %v213 = vpop.permute.xlu0 %212
    %216 = vset.pattern.permute.xlu0 0
    %217 = vperm.xlu0 %216, %v63
    %v218 = vpop.permute.xlu0 %217
    %221 = vset.pattern.permute.xlu0 0
    %222 = vperm.xlu0 %221, %v64
    %v223 = vpop.permute.xlu0 %222
    %226 = vset.pattern.permute.xlu0 0
    %227 = vperm.xlu0 %226, %v65
    %v228 = vpop.permute.xlu0 %227
    %231 = vset.pattern.permute.xlu0 0
    %232 = vperm.xlu0 %231, %v66
    %v233 = vpop.permute.xlu0 %232
    %236 = vset.pattern.permute.xlu0 0
    %237 = vperm.xlu0 %236, %v67
    %v238 = vpop.permute.xlu0 %237
    %241 = vset.pattern.permute.xlu0 0
    %242 = vperm.xlu0 %241, %v68
    %v243 = vpop.permute.xlu0 %242
    %246 = vset.pattern.permute.xlu0 0
    %247 = vperm.xlu0 %246, %v69
    %v248 = vpop.permute.xlu0 %247
    %v250 = vadd.f32 %v173, %v154
    %v251 = vadd.f32 %v178, %v155
    %v252 = vadd.f32 %v183, %v156
    %v253 = vadd.f32 %v188, %v157
    %v254 = vadd.f32 %v193, %v158
    %v255 = vadd.f32 %v198, %v159
    %v256 = vadd.f32 %v203, %v160
    %v257 = vadd.f32 %v208, %v161
    %v258 = vadd.f32 %v213, %v162
    %v259 = vadd.f32 %v218, %v163
    %v260 = vadd.f32 %v223, %v164
    %v261 = vadd.f32 %v228, %v165
    %v262 = vadd.f32 %v233, %v166
    %v263 = vadd.f32 %v238, %v167
    %v264 = vadd.f32 %v243, %v168
    %v265 = vadd.f32 %v248, %v169
    %266 = vset.pattern.permute.xlu0 1
    %267 = vperm.xlu0 %266, %v38
    %v268 = vpop.permute.xlu0 %267
    %270 = vset.pattern.permute.xlu0 1
    %271 = vperm.xlu0 %270, %v39
    %v272 = vpop.permute.xlu0 %271
    %274 = vset.pattern.permute.xlu0 1
    %275 = vperm.xlu0 %274, %v40
    %v276 = vpop.permute.xlu0 %275
    %278 = vset.pattern.permute.xlu0 1
    %279 = vperm.xlu0 %278, %v41
    %v280 = vpop.permute.xlu0 %279
    %282 = vset.pattern.permute.xlu0 1
    %283 = vperm.xlu0 %282, %v42
    %v284 = vpop.permute.xlu0 %283
    %286 = vset.pattern.permute.xlu0 1
    %287 = vperm.xlu0 %286, %v43
    %v288 = vpop.permute.xlu0 %287
    %290 = vset.pattern.permute.xlu0 1
    %291 = vperm.xlu0 %290, %v44
    %v292 = vpop.permute.xlu0 %291
    %294 = vset.pattern.permute.xlu0 1
    %295 = vperm.xlu0 %294, %v45
    %v296 = vpop.permute.xlu0 %295
    %298 = vset.pattern.permute.xlu0 1
    %299 = vperm.xlu0 %298, %v46
    %v300 = vpop.permute.xlu0 %299
    %302 = vset.pattern.permute.xlu0 1
    %303 = vperm.xlu0 %302, %v47
    %v304 = vpop.permute.xlu0 %303
    %306 = vset.pattern.permute.xlu0 1
    %307 = vperm.xlu0 %306, %v48
    %v308 = vpop.permute.xlu0 %307
    %310 = vset.pattern.permute.xlu0 1
    %311 = vperm.xlu0 %310, %v49
    %v312 = vpop.permute.xlu0 %311
    %314 = vset.pattern.permute.xlu0 1
    %315 = vperm.xlu0 %314, %v50
    %v316 = vpop.permute.xlu0 %315
    %318 = vset.pattern.permute.xlu0 1
    %319 = vperm.xlu0 %318, %v51
    %v320 = vpop.permute.xlu0 %319
    %322 = vset.pattern.permute.xlu0 1
    %323 = vperm.xlu0 %322, %v52
    %v324 = vpop.permute.xlu0 %323
    %326 = vset.pattern.permute.xlu0 1
    %327 = vperm.xlu0 %326, %v53
    %v328 = vpop.permute.xlu0 %327
    %v330 = vlaneseq
    %v331 = vshrl.u32 %v330, 7
    %v332 = vsub.s32 1, %v331
    %v333 = vrot.slane %v37, %v332
    %v334 = vmul.f32 %v268, %v333
    %v335 = vmul.f32 %v272, %v333
    %v336 = vmul.f32 %v276, %v333
    %v337 = vmul.f32 %v280, %v333
    %v338 = vmul.f32 %v284, %v333
    %v339 = vmul.f32 %v288, %v333
    %v340 = vmul.f32 %v292, %v333
    %v341 = vmul.f32 %v296, %v333
    %v342 = vmul.f32 %v300, %v333
    %v343 = vmul.f32 %v304, %v333
    %v344 = vmul.f32 %v308, %v333
    %v345 = vmul.f32 %v312, %v333
    %v346 = vmul.f32 %v316, %v333
    %v347 = vmul.f32 %v320, %v333
    %v348 = vmul.f32 %v324, %v333
    %v349 = vmul.f32 %v328, %v333
    %v350 = vadd.f32 %v250, %v334
    %v351 = vadd.f32 %v251, %v335
    %v352 = vadd.f32 %v252, %v336
    %v353 = vadd.f32 %v253, %v337
    %v354 = vadd.f32 %v254, %v338
    %v355 = vadd.f32 %v255, %v339
    %v356 = vadd.f32 %v256, %v340
    %v357 = vadd.f32 %v257, %v341
    %v358 = vadd.f32 %v258, %v342
    %v359 = vadd.f32 %v259, %v343
    %v360 = vadd.f32 %v260, %v344
    %v361 = vadd.f32 %v261, %v345
    %v362 = vadd.f32 %v262, %v346
    %v363 = vadd.f32 %v263, %v347
    %v364 = vadd.f32 %v264, %v348
    %v365 = vadd.f32 %v265, %v349
    %vm366 = vcmp.gt.f32.partialorder %v350, 0.0
    %vm367 = vcmp.gt.f32.partialorder %v351, 0.0
    %vm368 = vcmp.gt.f32.partialorder %v352, 0.0
    %vm369 = vcmp.gt.f32.partialorder %v353, 0.0
    %vm370 = vcmp.gt.f32.partialorder %v354, 0.0
    %vm371 = vcmp.gt.f32.partialorder %v355, 0.0
    %vm372 = vcmp.gt.f32.partialorder %v356, 0.0
    %vm373 = vcmp.gt.f32.partialorder %v357, 0.0
    %vm374 = vcmp.gt.f32.partialorder %v358, 0.0
    %vm375 = vcmp.gt.f32.partialorder %v359, 0.0
    %vm376 = vcmp.gt.f32.partialorder %v360, 0.0
    %vm377 = vcmp.gt.f32.partialorder %v361, 0.0
    %vm378 = vcmp.gt.f32.partialorder %v362, 0.0
    %vm379 = vcmp.gt.f32.partialorder %v363, 0.0
    %vm380 = vcmp.gt.f32.partialorder %v364, 0.0
    %vm381 = vcmp.gt.f32.partialorder %v365, 0.0
    %v382 = vmul.f32 %v350, 0.2
    %v383 = vmul.f32 %v351, 0.2
    %v384 = vmul.f32 %v352, 0.2
    %v385 = vmul.f32 %v353, 0.2
    %v386 = vmul.f32 %v354, 0.2
    %v387 = vmul.f32 %v355, 0.2
    %v388 = vmul.f32 %v356, 0.2
    %v389 = vmul.f32 %v357, 0.2
    %v390 = vmul.f32 %v358, 0.2
    %v391 = vmul.f32 %v359, 0.2
    %v392 = vmul.f32 %v360, 0.2
    %v393 = vmul.f32 %v361, 0.2
    %v394 = vmul.f32 %v362, 0.2
    %v395 = vmul.f32 %v363, 0.2
    %v396 = vmul.f32 %v364, 0.2
    %v397 = vmul.f32 %v365, 0.2
    %v398 = vsel %vm366, %v350, %v382
    %v399 = vsel %vm367, %v351, %v383
    %v400 = vsel %vm368, %v352, %v384
    %v401 = vsel %vm369, %v353, %v385
    %v402 = vsel %vm370, %v354, %v386
    %v403 = vsel %vm371, %v355, %v387
    %v404 = vsel %vm372, %v356, %v388
    %v405 = vsel %vm373, %v357, %v389
    %v406 = vsel %vm374, %v358, %v390
    %v407 = vsel %vm375, %v359, %v391
    %v408 = vsel %vm376, %v360, %v392
    %v409 = vsel %vm377, %v361, %v393
    %v410 = vsel %vm378, %v362, %v394
    %v411 = vsel %vm379, %v363, %v395
    %v412 = vsel %vm380, %v364, %v396
    %v413 = vsel %vm381, %v365, %v397
    %v414 = vld [vmem:[%s3] sm:$0xf]
    %v415 = vld [vmem:[%s3 + $0x4] sm:$0xf]
    %v416 = vld [vmem:[%s3 + $0x8] sm:$0xf]
    %v417 = vld [vmem:[%s3 + $0xc] sm:$0xf]
    %v418 = vld [vmem:[%s3 + $0x10] sm:$0xf]
    %v419 = vld [vmem:[%s3 + $0x14] sm:$0xf]
    %v420 = vld [vmem:[%s3 + $0x18] sm:$0xf]
    %v421 = vld [vmem:[%s3 + $0x1c] sm:$0xf]
    %v422 = vld [vmem:[%s3 + $0x20] sm:$0xf]
    %v423 = vld [vmem:[%s3 + $0x24] sm:$0xf]
    %v424 = vld [vmem:[%s3 + $0x28] sm:$0xf]
    %v425 = vld [vmem:[%s3 + $0x2c] sm:$0xf]
    %v426 = vld [vmem:[%s3 + $0x30] sm:$0xf]
    %v427 = vld [vmem:[%s3 + $0x34] sm:$0xf]
    %v428 = vld [vmem:[%s3 + $0x38] sm:$0xf]
    %v429 = vld [vmem:[%s3 + $0x3c] sm:$0xf]
    %v430 = vpack.c.bf16 %v399, %v398
    %v431 = vpack.c.bf16 %v401, %v400
    %v432 = vpack.c.bf16 %v403, %v402
    %v433 = vpack.c.bf16 %v405, %v404
    %v434 = vpack.c.bf16 %v407, %v406
    %v435 = vpack.c.bf16 %v409, %v408
    %v436 = vpack.c.bf16 %v411, %v410
    %v437 = vpack.c.bf16 %v413, %v412
    %v438 = vld [vmem:[%s4] sm:$0xff]
    %v439 = vld [vmem:[%s4 + $0x8] sm:$0xff]
    %v440 = vld [vmem:[%s4 + $0x10] sm:$0xff]
    %v441 = vld [vmem:[%s4 + $0x18] sm:$0xff]
    %v442 = vld [vmem:[%s4 + $0x20] sm:$0xff]
    %v443 = vld [vmem:[%s4 + $0x28] sm:$0xff]
    %v444 = vld [vmem:[%s4 + $0x30] sm:$0xff]
    %v445 = vld [vmem:[%s4 + $0x38] sm:$0xff]
    %v446 = vld [vmem:[%s4 + $0x40] sm:$0xff]
    %v447 = vld [vmem:[%s4 + $0x48] sm:$0xff]
    %v448 = vld [vmem:[%s4 + $0x50] sm:$0xff]
    %v449 = vld [vmem:[%s4 + $0x58] sm:$0xff]
    %v450 = vld [vmem:[%s4 + $0x60] sm:$0xff]
    %v451 = vld [vmem:[%s4 + $0x68] sm:$0xff]
    %v452 = vld [vmem:[%s4 + $0x70] sm:$0xff]
    %v453 = vld [vmem:[%s4 + $0x78] sm:$0xff]
    %455 = vset.pattern.permute.xlu0 0
    %456 = vperm.xlu0 %455, %v438
    %v457 = vpop.permute.xlu0 %456
    %460 = vset.pattern.permute.xlu0 0
    %461 = vperm.xlu0 %460, %v439
    %v462 = vpop.permute.xlu0 %461
    %465 = vset.pattern.permute.xlu0 0
    %466 = vperm.xlu0 %465, %v440
    %v467 = vpop.permute.xlu0 %466
    %470 = vset.pattern.permute.xlu0 0
    %471 = vperm.xlu0 %470, %v441
    %v472 = vpop.permute.xlu0 %471
    %475 = vset.pattern.permute.xlu0 0
    %476 = vperm.xlu0 %475, %v442
    %v477 = vpop.permute.xlu0 %476
    %480 = vset.pattern.permute.xlu0 0
    %481 = vperm.xlu0 %480, %v443
    %v482 = vpop.permute.xlu0 %481
    %485 = vset.pattern.permute.xlu0 0
    %486 = vperm.xlu0 %485, %v444
    %v487 = vpop.permute.xlu0 %486
    %490 = vset.pattern.permute.xlu0 0
    %491 = vperm.xlu0 %490, %v445
    %v492 = vpop.permute.xlu0 %491
    %495 = vset.pattern.permute.xlu0 0
    %496 = vperm.xlu0 %495, %v446
    %v497 = vpop.permute.xlu0 %496
    %500 = vset.pattern.permute.xlu0 0
    %501 = vperm.xlu0 %500, %v447
    %v502 = vpop.permute.xlu0 %501
    %505 = vset.pattern.permute.xlu0 0
    %506 = vperm.xlu0 %505, %v448
    %v507 = vpop.permute.xlu0 %506
    %510 = vset.pattern.permute.xlu0 0
    %511 = vperm.xlu0 %510, %v449
    %v512 = vpop.permute.xlu0 %511
    %515 = vset.pattern.permute.xlu0 0
    %516 = vperm.xlu0 %515, %v450
    %v517 = vpop.permute.xlu0 %516
    %520 = vset.pattern.permute.xlu0 0
    %521 = vperm.xlu0 %520, %v451
    %v522 = vpop.permute.xlu0 %521
    %525 = vset.pattern.permute.xlu0 0
    %526 = vperm.xlu0 %525, %v452
    %v527 = vpop.permute.xlu0 %526
    %530 = vset.pattern.permute.xlu0 0
    %531 = vperm.xlu0 %530, %v453
    %v532 = vpop.permute.xlu0 %531
    %v550 = vunpack.c.l.b16 %v414
    %v551 = vunpack.c.l.b16 %v415
    %v552 = vunpack.c.l.b16 %v416
    %v553 = vunpack.c.l.b16 %v417
    %v554 = vunpack.c.l.b16 %v418
    %v555 = vunpack.c.l.b16 %v419
    %v556 = vunpack.c.l.b16 %v420
    %v557 = vunpack.c.l.b16 %v421
    %v558 = vunpack.c.l.b16 %v422
    %v559 = vunpack.c.l.b16 %v423
    %v560 = vunpack.c.l.b16 %v424
    %v561 = vunpack.c.l.b16 %v425
    %v562 = vunpack.c.l.b16 %v426
    %v563 = vunpack.c.l.b16 %v427
    %v564 = vunpack.c.l.b16 %v428
    %v565 = vunpack.c.l.b16 %v429
    %v566 = vpack.c.b16 %v551, %v550
    %v567 = vpack.c.b16 %v553, %v552
    %v568 = vpack.c.b16 %v555, %v554
    %v569 = vpack.c.b16 %v557, %v556
    %v570 = vpack.c.b16 %v559, %v558
    %v571 = vpack.c.b16 %v561, %v560
    %v572 = vpack.c.b16 %v563, %v562
    %v573 = vpack.c.b16 %v565, %v564
    %582 = vmatprep.subr.bf16.mxu0 0
    %583 = vmatpush1.bf16.msra.mxu0 %v437
    %584 = vmatprep.subr.bf16.mxu0 0
    %585 = vmatpush1.bf16.msra.mxu0 %v436
    %586 = vmatprep.subr.bf16.mxu0 0
    %587 = vmatpush1.bf16.msra.mxu0 %v435
    %588 = vmatprep.subr.bf16.mxu0 0
    %589 = vmatpush1.bf16.msra.mxu0 %v434
    %590 = vmatprep.subr.bf16.mxu0 0
    %591 = vmatpush1.bf16.msra.mxu0 %v433
    %592 = vmatprep.subr.bf16.mxu0 0
    %593 = vmatpush1.bf16.msra.mxu0 %v432
    %594 = vmatprep.subr.bf16.mxu0 0
    %595 = vmatpush1.bf16.msra.mxu0 %v431
    %596 = vmatprep.subr.bf16.mxu0 0
    %597 = vmatpush1.bf16.msra.mxu0 %v430
    %598 = vmatprep.subr.bf16.mxu0 0
    %599 = vmatpush2.bf16.msra.mxu0 0
    %600 = vmatprep.subr.bf16.mxu0 0
    %601 = vmatpush2.bf16.msra.mxu0 0
    %602 = vmatprep.subr.bf16.mxu0 0
    %603 = vmatpush2.bf16.msra.mxu0 0
    %604 = vmatprep.subr.bf16.mxu0 0
    %605 = vmatpush2.bf16.msra.mxu0 0
    %606 = vmatprep.subr.bf16.mxu0 0
    %607 = vmatpush2.bf16.msra.mxu0 0
    %608 = vmatprep.subr.bf16.mxu0 0
    %609 = vmatpush2.bf16.msra.mxu0 0
    %610 = vmatprep.subr.bf16.mxu0 0
    %611 = vmatpush2.bf16.msra.mxu0 0
    %612 = vmatprep.subr.bf16.mxu0 0
    %613 = vmatpush2.bf16.msra.mxu0 0
    %614 = vmatprep.mubr.bf16.mxu0 0
    %615 = vmatmul.mubr.bf16.gmra.mxu0 %v566
    %v616 = vpop.f32.mrf.mxu0
    %v617 = vadd.f32 %v457, %v616
    %v618 = vpop.f32.mrf.mxu0
    %v619 = vpop.f32.mrf.mxu0
    %v620 = vadd.f32 %v462, %v619
    %v621 = vpop.f32.mrf.mxu0
    %622 = vmatprep.mubr.bf16.mxu0 0
    %623 = vmatmul.mubr.bf16.gmra.mxu0 %v567
    %v624 = vpop.f32.mrf.mxu0
    %v625 = vadd.f32 %v467, %v624
    %v626 = vpop.f32.mrf.mxu0
    %v627 = vpop.f32.mrf.mxu0
    %v628 = vadd.f32 %v472, %v627
    %v629 = vpop.f32.mrf.mxu0
    %630 = vmatprep.mubr.bf16.mxu0 0
    %631 = vmatmul.mubr.bf16.gmra.mxu0 %v568
    %v632 = vpop.f32.mrf.mxu0
    %v633 = vadd.f32 %v477, %v632
    %v634 = vpop.f32.mrf.mxu0
    %v635 = vpop.f32.mrf.mxu0
    %v636 = vadd.f32 %v482, %v635
    %v637 = vpop.f32.mrf.mxu0
    %638 = vmatprep.mubr.bf16.mxu0 0
    %639 = vmatmul.mubr.bf16.gmra.mxu0 %v569
    %v640 = vpop.f32.mrf.mxu0
    %v641 = vadd.f32 %v487, %v640
    %v642 = vpop.f32.mrf.mxu0
    %v643 = vpop.f32.mrf.mxu0
    %v644 = vadd.f32 %v492, %v643
    %v645 = vpop.f32.mrf.mxu0
    %646 = vmatprep.mubr.bf16.mxu0 0
    %647 = vmatmul.mubr.bf16.gmra.mxu0 %v570
    %v648 = vpop.f32.mrf.mxu0
    %v649 = vadd.f32 %v497, %v648
    %v650 = vpop.f32.mrf.mxu0
    %v651 = vpop.f32.mrf.mxu0
    %v652 = vadd.f32 %v502, %v651
    %v653 = vpop.f32.mrf.mxu0
    %654 = vmatprep.mubr.bf16.mxu0 0
    %655 = vmatmul.mubr.bf16.gmra.mxu0 %v571
    %v656 = vpop.f32.mrf.mxu0
    %v657 = vadd.f32 %v507, %v656
    %v658 = vpop.f32.mrf.mxu0
    %v659 = vpop.f32.mrf.mxu0
    %v660 = vadd.f32 %v512, %v659
    %v661 = vpop.f32.mrf.mxu0
    %662 = vmatprep.mubr.bf16.mxu0 0
    %663 = vmatmul.mubr.bf16.gmra.mxu0 %v572
    %v664 = vpop.f32.mrf.mxu0
    %v665 = vadd.f32 %v517, %v664
    %v666 = vpop.f32.mrf.mxu0
    %v667 = vpop.f32.mrf.mxu0
    %v668 = vadd.f32 %v522, %v667
    %v669 = vpop.f32.mrf.mxu0
    %670 = vmatprep.mubr.bf16.mxu0 0
    %671 = vmatmul.mubr.bf16.gmra.mxu0 %v573
    %v672 = vpop.f32.mrf.mxu0
    %v673 = vadd.f32 %v527, %v672
    %v674 = vpop.f32.mrf.mxu0
    %v675 = vpop.f32.mrf.mxu0
    %v676 = vadd.f32 %v532, %v675
    %v677 = vpop.f32.mrf.mxu0
    %678 = vdwg.mxu0
    %vm679 = vcmp.gt.f32.partialorder %v617, 0.0
    %vm680 = vcmp.gt.f32.partialorder %v620, 0.0
    %vm681 = vcmp.gt.f32.partialorder %v625, 0.0
    %vm682 = vcmp.gt.f32.partialorder %v628, 0.0
    %vm683 = vcmp.gt.f32.partialorder %v633, 0.0
    %vm684 = vcmp.gt.f32.partialorder %v636, 0.0
    %vm685 = vcmp.gt.f32.partialorder %v641, 0.0
    %vm686 = vcmp.gt.f32.partialorder %v644, 0.0
    %vm687 = vcmp.gt.f32.partialorder %v649, 0.0
    %vm688 = vcmp.gt.f32.partialorder %v652, 0.0
    %vm689 = vcmp.gt.f32.partialorder %v657, 0.0
    %vm690 = vcmp.gt.f32.partialorder %v660, 0.0
    %vm691 = vcmp.gt.f32.partialorder %v665, 0.0
    %vm692 = vcmp.gt.f32.partialorder %v668, 0.0
    %vm693 = vcmp.gt.f32.partialorder %v673, 0.0
    %vm694 = vcmp.gt.f32.partialorder %v676, 0.0
    %v695 = vmul.f32 %v617, 0.2
    %v696 = vmul.f32 %v620, 0.2
    %v697 = vmul.f32 %v625, 0.2
    %v698 = vmul.f32 %v628, 0.2
    %v699 = vmul.f32 %v633, 0.2
    %v700 = vmul.f32 %v636, 0.2
    %v701 = vmul.f32 %v641, 0.2
    %v702 = vmul.f32 %v644, 0.2
    %v703 = vmul.f32 %v649, 0.2
    %v704 = vmul.f32 %v652, 0.2
    %v705 = vmul.f32 %v657, 0.2
    %v706 = vmul.f32 %v660, 0.2
    %v707 = vmul.f32 %v665, 0.2
    %v708 = vmul.f32 %v668, 0.2
    %v709 = vmul.f32 %v673, 0.2
    %v710 = vmul.f32 %v676, 0.2
    %v711 = vsel %vm679, %v617, %v695
    %v712 = vsel %vm680, %v620, %v696
    %v713 = vsel %vm681, %v625, %v697
    %v714 = vsel %vm682, %v628, %v698
    %v715 = vsel %vm683, %v633, %v699
    %v716 = vsel %vm684, %v636, %v700
    %v717 = vsel %vm685, %v641, %v701
    %v718 = vsel %vm686, %v644, %v702
    %v719 = vsel %vm687, %v649, %v703
    %v720 = vsel %vm688, %v652, %v704
    %v721 = vsel %vm689, %v657, %v705
    %v722 = vsel %vm690, %v660, %v706
    %v723 = vsel %vm691, %v665, %v707
    %v724 = vsel %vm692, %v668, %v708
    %v725 = vsel %vm693, %v673, %v709
    %v726 = vsel %vm694, %v676, %v710
    %v727 = vld [vmem:[%s5] sm:$0xf]
    %v728 = vld [vmem:[%s5 + $0x4] sm:$0xf]
    %v729 = vld [vmem:[%s5 + $0x8] sm:$0xf]
    %v730 = vld [vmem:[%s5 + $0xc] sm:$0xf]
    %v731 = vld [vmem:[%s5 + $0x10] sm:$0xf]
    %v732 = vld [vmem:[%s5 + $0x14] sm:$0xf]
    %v733 = vld [vmem:[%s5 + $0x18] sm:$0xf]
    %v734 = vld [vmem:[%s5 + $0x1c] sm:$0xf]
    %v735 = vld [vmem:[%s5 + $0x20] sm:$0xf]
    %v736 = vld [vmem:[%s5 + $0x24] sm:$0xf]
    %v737 = vld [vmem:[%s5 + $0x28] sm:$0xf]
    %v738 = vld [vmem:[%s5 + $0x2c] sm:$0xf]
    %v739 = vld [vmem:[%s5 + $0x30] sm:$0xf]
    %v740 = vld [vmem:[%s5 + $0x34] sm:$0xf]
    %v741 = vld [vmem:[%s5 + $0x38] sm:$0xf]
    %v742 = vld [vmem:[%s5 + $0x3c] sm:$0xf]
    %v743 = vpack.c.bf16 %v712, %v711
    %v744 = vpack.c.bf16 %v714, %v713
    %v745 = vpack.c.bf16 %v716, %v715
    %v746 = vpack.c.bf16 %v718, %v717
    %v747 = vpack.c.bf16 %v720, %v719
    %v748 = vpack.c.bf16 %v722, %v721
    %v749 = vpack.c.bf16 %v724, %v723
    %v750 = vpack.c.bf16 %v726, %v725
    %v751 = vld [vmem:[%s6] sm:$0xff]
    %v752 = vld [vmem:[%s6 + $0x8] sm:$0xff]
    %v753 = vld [vmem:[%s6 + $0x10] sm:$0xff]
    %v754 = vld [vmem:[%s6 + $0x18] sm:$0xff]
    %v755 = vld [vmem:[%s6 + $0x20] sm:$0xff]
    %v756 = vld [vmem:[%s6 + $0x28] sm:$0xff]
    %v757 = vld [vmem:[%s6 + $0x30] sm:$0xff]
    %v758 = vld [vmem:[%s6 + $0x38] sm:$0xff]
    %v759 = vld [vmem:[%s6 + $0x40] sm:$0xff]
    %v760 = vld [vmem:[%s6 + $0x48] sm:$0xff]
    %v761 = vld [vmem:[%s6 + $0x50] sm:$0xff]
    %v762 = vld [vmem:[%s6 + $0x58] sm:$0xff]
    %v763 = vld [vmem:[%s6 + $0x60] sm:$0xff]
    %v764 = vld [vmem:[%s6 + $0x68] sm:$0xff]
    %v765 = vld [vmem:[%s6 + $0x70] sm:$0xff]
    %v766 = vld [vmem:[%s6 + $0x78] sm:$0xff]
    %768 = vset.pattern.permute.xlu0 0
    %769 = vperm.xlu0 %768, %v751
    %v770 = vpop.permute.xlu0 %769
    %773 = vset.pattern.permute.xlu0 0
    %774 = vperm.xlu0 %773, %v752
    %v775 = vpop.permute.xlu0 %774
    %778 = vset.pattern.permute.xlu0 0
    %779 = vperm.xlu0 %778, %v753
    %v780 = vpop.permute.xlu0 %779
    %783 = vset.pattern.permute.xlu0 0
    %784 = vperm.xlu0 %783, %v754
    %v785 = vpop.permute.xlu0 %784
    %788 = vset.pattern.permute.xlu0 0
    %789 = vperm.xlu0 %788, %v755
    %v790 = vpop.permute.xlu0 %789
    %793 = vset.pattern.permute.xlu0 0
    %794 = vperm.xlu0 %793, %v756
    %v795 = vpop.permute.xlu0 %794
    %798 = vset.pattern.permute.xlu0 0
    %799 = vperm.xlu0 %798, %v757
    %v800 = vpop.permute.xlu0 %799
    %803 = vset.pattern.permute.xlu0 0
    %804 = vperm.xlu0 %803, %v758
    %v805 = vpop.permute.xlu0 %804
    %808 = vset.pattern.permute.xlu0 0
    %809 = vperm.xlu0 %808, %v759
    %v810 = vpop.permute.xlu0 %809
    %813 = vset.pattern.permute.xlu0 0
    %814 = vperm.xlu0 %813, %v760
    %v815 = vpop.permute.xlu0 %814
    %818 = vset.pattern.permute.xlu0 0
    %819 = vperm.xlu0 %818, %v761
    %v820 = vpop.permute.xlu0 %819
    %823 = vset.pattern.permute.xlu0 0
    %824 = vperm.xlu0 %823, %v762
    %v825 = vpop.permute.xlu0 %824
    %828 = vset.pattern.permute.xlu0 0
    %829 = vperm.xlu0 %828, %v763
    %v830 = vpop.permute.xlu0 %829
    %833 = vset.pattern.permute.xlu0 0
    %834 = vperm.xlu0 %833, %v764
    %v835 = vpop.permute.xlu0 %834
    %838 = vset.pattern.permute.xlu0 0
    %839 = vperm.xlu0 %838, %v765
    %v840 = vpop.permute.xlu0 %839
    %843 = vset.pattern.permute.xlu0 0
    %844 = vperm.xlu0 %843, %v766
    %v845 = vpop.permute.xlu0 %844
    %v863 = vunpack.c.l.b16 %v727
    %v864 = vunpack.c.l.b16 %v728
    %v865 = vunpack.c.l.b16 %v729
    %v866 = vunpack.c.l.b16 %v730
    %v867 = vunpack.c.l.b16 %v731
    %v868 = vunpack.c.l.b16 %v732
    %v869 = vunpack.c.l.b16 %v733
    %v870 = vunpack.c.l.b16 %v734
    %v871 = vunpack.c.l.b16 %v735
    %v872 = vunpack.c.l.b16 %v736
    %v873 = vunpack.c.l.b16 %v737
    %v874 = vunpack.c.l.b16 %v738
    %v875 = vunpack.c.l.b16 %v739
    %v876 = vunpack.c.l.b16 %v740
    %v877 = vunpack.c.l.b16 %v741
    %v878 = vunpack.c.l.b16 %v742
    %v879 = vpack.c.b16 %v864, %v863
    %v880 = vpack.c.b16 %v866, %v865
    %v881 = vpack.c.b16 %v868, %v867
    %v882 = vpack.c.b16 %v870, %v869
    %v883 = vpack.c.b16 %v872, %v871
    %v884 = vpack.c.b16 %v874, %v873
    %v885 = vpack.c.b16 %v876, %v875
    %v886 = vpack.c.b16 %v878, %v877
    %895 = vmatprep.subr.bf16.mxu0 0
    %896 = vmatpush1.bf16.msra.mxu0 %v750
    %897 = vmatprep.subr.bf16.mxu0 0
    %898 = vmatpush1.bf16.msra.mxu0 %v749
    %899 = vmatprep.subr.bf16.mxu0 0
    %900 = vmatpush1.bf16.msra.mxu0 %v748
    %901 = vmatprep.subr.bf16.mxu0 0
    %902 = vmatpush1.bf16.msra.mxu0 %v747
    %903 = vmatprep.subr.bf16.mxu0 0
    %904 = vmatpush1.bf16.msra.mxu0 %v746
    %905 = vmatprep.subr.bf16.mxu0 0
    %906 = vmatpush1.bf16.msra.mxu0 %v745
    %907 = vmatprep.subr.bf16.mxu0 0
    %908 = vmatpush1.bf16.msra.mxu0 %v744
    %909 = vmatprep.subr.bf16.mxu0 0
    %910 = vmatpush1.bf16.msra.mxu0 %v743
    %911 = vmatprep.subr.bf16.mxu0 0
    %912 = vmatpush2.bf16.msra.mxu0 0
    %913 = vmatprep.subr.bf16.mxu0 0
    %914 = vmatpush2.bf16.msra.mxu0 0
    %915 = vmatprep.subr.bf16.mxu0 0
    %916 = vmatpush2.bf16.msra.mxu0 0
    %917 = vmatprep.subr.bf16.mxu0 0
    %918 = vmatpush2.bf16.msra.mxu0 0
    %919 = vmatprep.subr.bf16.mxu0 0
    %920 = vmatpush2.bf16.msra.mxu0 0
    %921 = vmatprep.subr.bf16.mxu0 0
    %922 = vmatpush2.bf16.msra.mxu0 0
    %923 = vmatprep.subr.bf16.mxu0 0
    %924 = vmatpush2.bf16.msra.mxu0 0
    %925 = vmatprep.subr.bf16.mxu0 0
    %926 = vmatpush2.bf16.msra.mxu0 0
    %927 = vmatprep.mubr.bf16.mxu0 0
    %928 = vmatmul.mubr.bf16.gmra.mxu0 %v879
    %v929 = vpop.f32.mrf.mxu0
    %v930 = vadd.f32 %v770, %v929
    %v931 = vpop.f32.mrf.mxu0
    %v932 = vpop.f32.mrf.mxu0
    %v933 = vadd.f32 %v775, %v932
    %v934 = vpop.f32.mrf.mxu0
    %935 = vmatprep.mubr.bf16.mxu0 0
    %936 = vmatmul.mubr.bf16.gmra.mxu0 %v880
    %v937 = vpop.f32.mrf.mxu0
    %v938 = vadd.f32 %v780, %v937
    %v939 = vpop.f32.mrf.mxu0
    %v940 = vpop.f32.mrf.mxu0
    %v941 = vadd.f32 %v785, %v940
    %v942 = vpop.f32.mrf.mxu0
    %943 = vmatprep.mubr.bf16.mxu0 0
    %944 = vmatmul.mubr.bf16.gmra.mxu0 %v881
    %v945 = vpop.f32.mrf.mxu0
    %v946 = vadd.f32 %v790, %v945
    %v947 = vpop.f32.mrf.mxu0
    %v948 = vpop.f32.mrf.mxu0
    %v949 = vadd.f32 %v795, %v948
    %v950 = vpop.f32.mrf.mxu0
    %951 = vmatprep.mubr.bf16.mxu0 0
    %952 = vmatmul.mubr.bf16.gmra.mxu0 %v882
    %v953 = vpop.f32.mrf.mxu0
    %v954 = vadd.f32 %v800, %v953
    %v955 = vpop.f32.mrf.mxu0
    %v956 = vpop.f32.mrf.mxu0
    %v957 = vadd.f32 %v805, %v956
    %v958 = vpop.f32.mrf.mxu0
    %959 = vmatprep.mubr.bf16.mxu0 0
    %960 = vmatmul.mubr.bf16.gmra.mxu0 %v883
    %v961 = vpop.f32.mrf.mxu0
    %v962 = vadd.f32 %v810, %v961
    %v963 = vpop.f32.mrf.mxu0
    %v964 = vpop.f32.mrf.mxu0
    %v965 = vadd.f32 %v815, %v964
    %v966 = vpop.f32.mrf.mxu0
    %967 = vmatprep.mubr.bf16.mxu0 0
    %968 = vmatmul.mubr.bf16.gmra.mxu0 %v884
    %v969 = vpop.f32.mrf.mxu0
    %v970 = vadd.f32 %v820, %v969
    %v971 = vpop.f32.mrf.mxu0
    %v972 = vpop.f32.mrf.mxu0
    %v973 = vadd.f32 %v825, %v972
    %v974 = vpop.f32.mrf.mxu0
    %975 = vmatprep.mubr.bf16.mxu0 0
    %976 = vmatmul.mubr.bf16.gmra.mxu0 %v885
    %v977 = vpop.f32.mrf.mxu0
    %v978 = vadd.f32 %v830, %v977
    %v979 = vpop.f32.mrf.mxu0
    %v980 = vpop.f32.mrf.mxu0
    %v981 = vadd.f32 %v835, %v980
    %v982 = vpop.f32.mrf.mxu0
    %983 = vmatprep.mubr.bf16.mxu0 0
    %984 = vmatmul.mubr.bf16.gmra.mxu0 %v886
    %v985 = vpop.f32.mrf.mxu0
    %v986 = vadd.f32 %v840, %v985
    %v987 = vpop.f32.mrf.mxu0
    %v988 = vpop.f32.mrf.mxu0
    %v989 = vadd.f32 %v845, %v988
    %v990 = vpop.f32.mrf.mxu0
    %991 = vdwg.mxu0
    %vm992 = vcmp.gt.f32.partialorder %v930, 0.0
    %vm993 = vcmp.gt.f32.partialorder %v933, 0.0
    %vm994 = vcmp.gt.f32.partialorder %v938, 0.0
    %vm995 = vcmp.gt.f32.partialorder %v941, 0.0
    %vm996 = vcmp.gt.f32.partialorder %v946, 0.0
    %vm997 = vcmp.gt.f32.partialorder %v949, 0.0
    %vm998 = vcmp.gt.f32.partialorder %v954, 0.0
    %vm999 = vcmp.gt.f32.partialorder %v957, 0.0
    %vm1000 = vcmp.gt.f32.partialorder %v962, 0.0
    %vm1001 = vcmp.gt.f32.partialorder %v965, 0.0
    %vm1002 = vcmp.gt.f32.partialorder %v970, 0.0
    %vm1003 = vcmp.gt.f32.partialorder %v973, 0.0
    %vm1004 = vcmp.gt.f32.partialorder %v978, 0.0
    %vm1005 = vcmp.gt.f32.partialorder %v981, 0.0
    %vm1006 = vcmp.gt.f32.partialorder %v986, 0.0
    %vm1007 = vcmp.gt.f32.partialorder %v989, 0.0
    %v1008 = vmul.f32 %v930, 0.2
    %v1009 = vmul.f32 %v933, 0.2
    %v1010 = vmul.f32 %v938, 0.2
    %v1011 = vmul.f32 %v941, 0.2
    %v1012 = vmul.f32 %v946, 0.2
    %v1013 = vmul.f32 %v949, 0.2
    %v1014 = vmul.f32 %v954, 0.2
    %v1015 = vmul.f32 %v957, 0.2
    %v1016 = vmul.f32 %v962, 0.2
    %v1017 = vmul.f32 %v965, 0.2
    %v1018 = vmul.f32 %v970, 0.2
    %v1019 = vmul.f32 %v973, 0.2
    %v1020 = vmul.f32 %v978, 0.2
    %v1021 = vmul.f32 %v981, 0.2
    %v1022 = vmul.f32 %v986, 0.2
    %v1023 = vmul.f32 %v989, 0.2
    %v1024 = vsel %vm992, %v930, %v1008
    %v1025 = vsel %vm993, %v933, %v1009
    %v1026 = vsel %vm994, %v938, %v1010
    %v1027 = vsel %vm995, %v941, %v1011
    %v1028 = vsel %vm996, %v946, %v1012
    %v1029 = vsel %vm997, %v949, %v1013
    %v1030 = vsel %vm998, %v954, %v1014
    %v1031 = vsel %vm999, %v957, %v1015
    %v1032 = vsel %vm1000, %v962, %v1016
    %v1033 = vsel %vm1001, %v965, %v1017
    %v1034 = vsel %vm1002, %v970, %v1018
    %v1035 = vsel %vm1003, %v973, %v1019
    %v1036 = vsel %vm1004, %v978, %v1020
    %v1037 = vsel %vm1005, %v981, %v1021
    %v1038 = vsel %vm1006, %v986, %v1022
    %v1039 = vsel %vm1007, %v989, %v1023
    %v1040 = vld [vmem:[%s7] sm:$0xf]
    %v1041 = vld [vmem:[%s7 + $0x4] sm:$0xf]
    %v1042 = vld [vmem:[%s7 + $0x8] sm:$0xf]
    %v1043 = vld [vmem:[%s7 + $0xc] sm:$0xf]
    %v1044 = vld [vmem:[%s7 + $0x10] sm:$0xf]
    %v1045 = vld [vmem:[%s7 + $0x14] sm:$0xf]
    %v1046 = vld [vmem:[%s7 + $0x18] sm:$0xf]
    %v1047 = vld [vmem:[%s7 + $0x1c] sm:$0xf]
    %v1048 = vld [vmem:[%s7 + $0x20] sm:$0xf]
    %v1049 = vld [vmem:[%s7 + $0x24] sm:$0xf]
    %v1050 = vld [vmem:[%s7 + $0x28] sm:$0xf]
    %v1051 = vld [vmem:[%s7 + $0x2c] sm:$0xf]
    %v1052 = vld [vmem:[%s7 + $0x30] sm:$0xf]
    %v1053 = vld [vmem:[%s7 + $0x34] sm:$0xf]
    %v1054 = vld [vmem:[%s7 + $0x38] sm:$0xf]
    %v1055 = vld [vmem:[%s7 + $0x3c] sm:$0xf]
    %v1056 = vpack.c.bf16 %v1025, %v1024
    %v1057 = vpack.c.bf16 %v1027, %v1026
    %v1058 = vpack.c.bf16 %v1029, %v1028
    %v1059 = vpack.c.bf16 %v1031, %v1030
    %v1060 = vpack.c.bf16 %v1033, %v1032
    %v1061 = vpack.c.bf16 %v1035, %v1034
    %v1062 = vpack.c.bf16 %v1037, %v1036
    %v1063 = vpack.c.bf16 %v1039, %v1038
    %v1064 = vld [vmem:[%s8] sm:$0xff]
    %v1065 = vld [vmem:[%s8 + $0x8] sm:$0xff]
    %v1066 = vld [vmem:[%s8 + $0x10] sm:$0xff]
    %v1067 = vld [vmem:[%s8 + $0x18] sm:$0xff]
    %v1068 = vld [vmem:[%s8 + $0x20] sm:$0xff]
    %v1069 = vld [vmem:[%s8 + $0x28] sm:$0xff]
    %v1070 = vld [vmem:[%s8 + $0x30] sm:$0xff]
    %v1071 = vld [vmem:[%s8 + $0x38] sm:$0xff]
    %v1072 = vld [vmem:[%s8 + $0x40] sm:$0xff]
    %v1073 = vld [vmem:[%s8 + $0x48] sm:$0xff]
    %v1074 = vld [vmem:[%s8 + $0x50] sm:$0xff]
    %v1075 = vld [vmem:[%s8 + $0x58] sm:$0xff]
    %v1076 = vld [vmem:[%s8 + $0x60] sm:$0xff]
    %v1077 = vld [vmem:[%s8 + $0x68] sm:$0xff]
    %v1078 = vld [vmem:[%s8 + $0x70] sm:$0xff]
    %v1079 = vld [vmem:[%s8 + $0x78] sm:$0xff]
    %1081 = vset.pattern.permute.xlu0 0
    %1082 = vperm.xlu0 %1081, %v1064
    %v1083 = vpop.permute.xlu0 %1082
    %1086 = vset.pattern.permute.xlu0 0
    %1087 = vperm.xlu0 %1086, %v1065
    %v1088 = vpop.permute.xlu0 %1087
    %1091 = vset.pattern.permute.xlu0 0
    %1092 = vperm.xlu0 %1091, %v1066
    %v1093 = vpop.permute.xlu0 %1092
    %1096 = vset.pattern.permute.xlu0 0
    %1097 = vperm.xlu0 %1096, %v1067
    %v1098 = vpop.permute.xlu0 %1097
    %1101 = vset.pattern.permute.xlu0 0
    %1102 = vperm.xlu0 %1101, %v1068
    %v1103 = vpop.permute.xlu0 %1102
    %1106 = vset.pattern.permute.xlu0 0
    %1107 = vperm.xlu0 %1106, %v1069
    %v1108 = vpop.permute.xlu0 %1107
    %1111 = vset.pattern.permute.xlu0 0
    %1112 = vperm.xlu0 %1111, %v1070
    %v1113 = vpop.permute.xlu0 %1112
    %1116 = vset.pattern.permute.xlu0 0
    %1117 = vperm.xlu0 %1116, %v1071
    %v1118 = vpop.permute.xlu0 %1117
    %1121 = vset.pattern.permute.xlu0 0
    %1122 = vperm.xlu0 %1121, %v1072
    %v1123 = vpop.permute.xlu0 %1122
    %1126 = vset.pattern.permute.xlu0 0
    %1127 = vperm.xlu0 %1126, %v1073
    %v1128 = vpop.permute.xlu0 %1127
    %1131 = vset.pattern.permute.xlu0 0
    %1132 = vperm.xlu0 %1131, %v1074
    %v1133 = vpop.permute.xlu0 %1132
    %1136 = vset.pattern.permute.xlu0 0
    %1137 = vperm.xlu0 %1136, %v1075
    %v1138 = vpop.permute.xlu0 %1137
    %1141 = vset.pattern.permute.xlu0 0
    %1142 = vperm.xlu0 %1141, %v1076
    %v1143 = vpop.permute.xlu0 %1142
    %1146 = vset.pattern.permute.xlu0 0
    %1147 = vperm.xlu0 %1146, %v1077
    %v1148 = vpop.permute.xlu0 %1147
    %1151 = vset.pattern.permute.xlu0 0
    %1152 = vperm.xlu0 %1151, %v1078
    %v1153 = vpop.permute.xlu0 %1152
    %1156 = vset.pattern.permute.xlu0 0
    %1157 = vperm.xlu0 %1156, %v1079
    %v1158 = vpop.permute.xlu0 %1157
    %v1176 = vunpack.c.l.b16 %v1040
    %v1177 = vunpack.c.l.b16 %v1041
    %v1178 = vunpack.c.l.b16 %v1042
    %v1179 = vunpack.c.l.b16 %v1043
    %v1180 = vunpack.c.l.b16 %v1044
    %v1181 = vunpack.c.l.b16 %v1045
    %v1182 = vunpack.c.l.b16 %v1046
    %v1183 = vunpack.c.l.b16 %v1047
    %v1184 = vunpack.c.l.b16 %v1048
    %v1185 = vunpack.c.l.b16 %v1049
    %v1186 = vunpack.c.l.b16 %v1050
    %v1187 = vunpack.c.l.b16 %v1051
    %v1188 = vunpack.c.l.b16 %v1052
    %v1189 = vunpack.c.l.b16 %v1053
    %v1190 = vunpack.c.l.b16 %v1054
    %v1191 = vunpack.c.l.b16 %v1055
    %v1192 = vpack.c.b16 %v1177, %v1176
    %v1193 = vpack.c.b16 %v1179, %v1178
    %v1194 = vpack.c.b16 %v1181, %v1180
    %v1195 = vpack.c.b16 %v1183, %v1182
    %v1196 = vpack.c.b16 %v1185, %v1184
    %v1197 = vpack.c.b16 %v1187, %v1186
    %v1198 = vpack.c.b16 %v1189, %v1188
    %v1199 = vpack.c.b16 %v1191, %v1190
    %1208 = vmatprep.subr.bf16.mxu0 0
    %1209 = vmatpush1.bf16.msra.mxu0 %v1063
    %1210 = vmatprep.subr.bf16.mxu0 0
    %1211 = vmatpush1.bf16.msra.mxu0 %v1062
    %1212 = vmatprep.subr.bf16.mxu0 0
    %1213 = vmatpush1.bf16.msra.mxu0 %v1061
    %1214 = vmatprep.subr.bf16.mxu0 0
    %1215 = vmatpush1.bf16.msra.mxu0 %v1060
    %1216 = vmatprep.subr.bf16.mxu0 0
    %1217 = vmatpush1.bf16.msra.mxu0 %v1059
    %1218 = vmatprep.subr.bf16.mxu0 0
    %1219 = vmatpush1.bf16.msra.mxu0 %v1058
    %1220 = vmatprep.subr.bf16.mxu0 0
    %1221 = vmatpush1.bf16.msra.mxu0 %v1057
    %1222 = vmatprep.subr.bf16.mxu0 0
    %1223 = vmatpush1.bf16.msra.mxu0 %v1056
    %1224 = vmatprep.subr.bf16.mxu0 0
    %1225 = vmatpush2.bf16.msra.mxu0 0
    %1226 = vmatprep.subr.bf16.mxu0 0
    %1227 = vmatpush2.bf16.msra.mxu0 0
    %1228 = vmatprep.subr.bf16.mxu0 0
    %1229 = vmatpush2.bf16.msra.mxu0 0
    %1230 = vmatprep.subr.bf16.mxu0 0
    %1231 = vmatpush2.bf16.msra.mxu0 0
    %1232 = vmatprep.subr.bf16.mxu0 0
    %1233 = vmatpush2.bf16.msra.mxu0 0
    %1234 = vmatprep.subr.bf16.mxu0 0
    %1235 = vmatpush2.bf16.msra.mxu0 0
    %1236 = vmatprep.subr.bf16.mxu0 0
    %1237 = vmatpush2.bf16.msra.mxu0 0
    %1238 = vmatprep.subr.bf16.mxu0 0
    %1239 = vmatpush2.bf16.msra.mxu0 0
    %1240 = vmatprep.mubr.bf16.mxu0 0
    %1241 = vmatmul.mubr.bf16.gmra.mxu0 %v1192
    %v1242 = vpop.f32.mrf.mxu0
    %v1243 = vadd.f32 %v1083, %v1242
    %v1244 = vpop.f32.mrf.mxu0
    %v1245 = vpop.f32.mrf.mxu0
    %v1246 = vadd.f32 %v1088, %v1245
    %v1247 = vpop.f32.mrf.mxu0
    %1248 = vmatprep.mubr.bf16.mxu0 0
    %1249 = vmatmul.mubr.bf16.gmra.mxu0 %v1193
    %v1250 = vpop.f32.mrf.mxu0
    %v1251 = vadd.f32 %v1093, %v1250
    %v1252 = vpop.f32.mrf.mxu0
    %v1253 = vpop.f32.mrf.mxu0
    %v1254 = vadd.f32 %v1098, %v1253
    %v1255 = vpop.f32.mrf.mxu0
    %1256 = vmatprep.mubr.bf16.mxu0 0
    %1257 = vmatmul.mubr.bf16.gmra.mxu0 %v1194
    %v1258 = vpop.f32.mrf.mxu0
    %v1259 = vadd.f32 %v1103, %v1258
    %v1260 = vpop.f32.mrf.mxu0
    %v1261 = vpop.f32.mrf.mxu0
    %v1262 = vadd.f32 %v1108, %v1261
    %v1263 = vpop.f32.mrf.mxu0
    %1264 = vmatprep.mubr.bf16.mxu0 0
    %1265 = vmatmul.mubr.bf16.gmra.mxu0 %v1195
    %v1266 = vpop.f32.mrf.mxu0
    %v1267 = vadd.f32 %v1113, %v1266
    %v1268 = vpop.f32.mrf.mxu0
    %v1269 = vpop.f32.mrf.mxu0
    %v1270 = vadd.f32 %v1118, %v1269
    %v1271 = vpop.f32.mrf.mxu0
    %1272 = vmatprep.mubr.bf16.mxu0 0
    %1273 = vmatmul.mubr.bf16.gmra.mxu0 %v1196
    %v1274 = vpop.f32.mrf.mxu0
    %v1275 = vadd.f32 %v1123, %v1274
    %v1276 = vpop.f32.mrf.mxu0
    %v1277 = vpop.f32.mrf.mxu0
    %v1278 = vadd.f32 %v1128, %v1277
    %v1279 = vpop.f32.mrf.mxu0
    %1280 = vmatprep.mubr.bf16.mxu0 0
    %1281 = vmatmul.mubr.bf16.gmra.mxu0 %v1197
    %v1282 = vpop.f32.mrf.mxu0
    %v1283 = vadd.f32 %v1133, %v1282
    %v1284 = vpop.f32.mrf.mxu0
    %v1285 = vpop.f32.mrf.mxu0
    %v1286 = vadd.f32 %v1138, %v1285
    %v1287 = vpop.f32.mrf.mxu0
    %1288 = vmatprep.mubr.bf16.mxu0 0
    %1289 = vmatmul.mubr.bf16.gmra.mxu0 %v1198
    %v1290 = vpop.f32.mrf.mxu0
    %v1291 = vadd.f32 %v1143, %v1290
    %v1292 = vpop.f32.mrf.mxu0
    %v1293 = vpop.f32.mrf.mxu0
    %v1294 = vadd.f32 %v1148, %v1293
    %v1295 = vpop.f32.mrf.mxu0
    %1296 = vmatprep.mubr.bf16.mxu0 0
    %1297 = vmatmul.mubr.bf16.gmra.mxu0 %v1199
    %v1298 = vpop.f32.mrf.mxu0
    %v1299 = vadd.f32 %v1153, %v1298
    %v1300 = vpop.f32.mrf.mxu0
    %v1301 = vpop.f32.mrf.mxu0
    %v1302 = vadd.f32 %v1158, %v1301
    %v1303 = vpop.f32.mrf.mxu0
    %1304 = vdwg.mxu0
    %vm1305 = vcmp.gt.f32.partialorder %v1243, 0.0
    %vm1306 = vcmp.gt.f32.partialorder %v1246, 0.0
    %vm1307 = vcmp.gt.f32.partialorder %v1251, 0.0
    %vm1308 = vcmp.gt.f32.partialorder %v1254, 0.0
    %vm1309 = vcmp.gt.f32.partialorder %v1259, 0.0
    %vm1310 = vcmp.gt.f32.partialorder %v1262, 0.0
    %vm1311 = vcmp.gt.f32.partialorder %v1267, 0.0
    %vm1312 = vcmp.gt.f32.partialorder %v1270, 0.0
    %vm1313 = vcmp.gt.f32.partialorder %v1275, 0.0
    %vm1314 = vcmp.gt.f32.partialorder %v1278, 0.0
    %vm1315 = vcmp.gt.f32.partialorder %v1283, 0.0
    %vm1316 = vcmp.gt.f32.partialorder %v1286, 0.0
    %vm1317 = vcmp.gt.f32.partialorder %v1291, 0.0
    %vm1318 = vcmp.gt.f32.partialorder %v1294, 0.0
    %vm1319 = vcmp.gt.f32.partialorder %v1299, 0.0
    %vm1320 = vcmp.gt.f32.partialorder %v1302, 0.0
    %v1321 = vmul.f32 %v1243, 0.2
    %v1322 = vmul.f32 %v1246, 0.2
    %v1323 = vmul.f32 %v1251, 0.2
    %v1324 = vmul.f32 %v1254, 0.2
    %v1325 = vmul.f32 %v1259, 0.2
    %v1326 = vmul.f32 %v1262, 0.2
    %v1327 = vmul.f32 %v1267, 0.2
    %v1328 = vmul.f32 %v1270, 0.2
    %v1329 = vmul.f32 %v1275, 0.2
    %v1330 = vmul.f32 %v1278, 0.2
    %v1331 = vmul.f32 %v1283, 0.2
    %v1332 = vmul.f32 %v1286, 0.2
    %v1333 = vmul.f32 %v1291, 0.2
    %v1334 = vmul.f32 %v1294, 0.2
    %v1335 = vmul.f32 %v1299, 0.2
    %v1336 = vmul.f32 %v1302, 0.2
    %v1337 = vsel %vm1305, %v1243, %v1321
    %v1338 = vsel %vm1306, %v1246, %v1322
    %v1339 = vsel %vm1307, %v1251, %v1323
    %v1340 = vsel %vm1308, %v1254, %v1324
    %v1341 = vsel %vm1309, %v1259, %v1325
    %v1342 = vsel %vm1310, %v1262, %v1326
    %v1343 = vsel %vm1311, %v1267, %v1327
    %v1344 = vsel %vm1312, %v1270, %v1328
    %v1345 = vsel %vm1313, %v1275, %v1329
    %v1346 = vsel %vm1314, %v1278, %v1330
    %v1347 = vsel %vm1315, %v1283, %v1331
    %v1348 = vsel %vm1316, %v1286, %v1332
    %v1349 = vsel %vm1317, %v1291, %v1333
    %v1350 = vsel %vm1318, %v1294, %v1334
    %v1351 = vsel %vm1319, %v1299, %v1335
    %v1352 = vsel %vm1320, %v1302, %v1336
    %v1353 = vld [vmem:[%s9] sm:$0xff]
    %v1354 = vld [vmem:[%s9 + $0x8] sm:$0xff]
    %v1355 = vld [vmem:[%s9 + $0x10] sm:$0xff]
    %v1356 = vld [vmem:[%s9 + $0x18] sm:$0xff]
    %v1357 = vld [vmem:[%s9 + $0x20] sm:$0xff]
    %v1358 = vld [vmem:[%s9 + $0x28] sm:$0xff]
    %v1359 = vld [vmem:[%s9 + $0x30] sm:$0xff]
    %v1360 = vld [vmem:[%s9 + $0x38] sm:$0xff]
    %v1361 = vld [vmem:[%s9 + $0x40] sm:$0xff]
    %v1362 = vld [vmem:[%s9 + $0x48] sm:$0xff]
    %v1363 = vld [vmem:[%s9 + $0x50] sm:$0xff]
    %v1364 = vld [vmem:[%s9 + $0x58] sm:$0xff]
    %v1365 = vld [vmem:[%s9 + $0x60] sm:$0xff]
    %v1366 = vld [vmem:[%s9 + $0x68] sm:$0xff]
    %v1367 = vld [vmem:[%s9 + $0x70] sm:$0xff]
    %v1368 = vld [vmem:[%s9 + $0x78] sm:$0xff]
    %1370 = vset.pattern.permute.xlu0 0
    %1371 = vperm.xlu0 %1370, %v1353
    %v1372 = vpop.permute.xlu0 %1371
    %1375 = vset.pattern.permute.xlu0 0
    %1376 = vperm.xlu0 %1375, %v1354
    %v1377 = vpop.permute.xlu0 %1376
    %1380 = vset.pattern.permute.xlu0 0
    %1381 = vperm.xlu0 %1380, %v1355
    %v1382 = vpop.permute.xlu0 %1381
    %1385 = vset.pattern.permute.xlu0 0
    %1386 = vperm.xlu0 %1385, %v1356
    %v1387 = vpop.permute.xlu0 %1386
    %1390 = vset.pattern.permute.xlu0 0
    %1391 = vperm.xlu0 %1390, %v1357
    %v1392 = vpop.permute.xlu0 %1391
    %1395 = vset.pattern.permute.xlu0 0
    %1396 = vperm.xlu0 %1395, %v1358
    %v1397 = vpop.permute.xlu0 %1396
    %1400 = vset.pattern.permute.xlu0 0
    %1401 = vperm.xlu0 %1400, %v1359
    %v1402 = vpop.permute.xlu0 %1401
    %1405 = vset.pattern.permute.xlu0 0
    %1406 = vperm.xlu0 %1405, %v1360
    %v1407 = vpop.permute.xlu0 %1406
    %1410 = vset.pattern.permute.xlu0 0
    %1411 = vperm.xlu0 %1410, %v1361
    %v1412 = vpop.permute.xlu0 %1411
    %1415 = vset.pattern.permute.xlu0 0
    %1416 = vperm.xlu0 %1415, %v1362
    %v1417 = vpop.permute.xlu0 %1416
    %1420 = vset.pattern.permute.xlu0 0
    %1421 = vperm.xlu0 %1420, %v1363
    %v1422 = vpop.permute.xlu0 %1421
    %1425 = vset.pattern.permute.xlu0 0
    %1426 = vperm.xlu0 %1425, %v1364
    %v1427 = vpop.permute.xlu0 %1426
    %1430 = vset.pattern.permute.xlu0 0
    %1431 = vperm.xlu0 %1430, %v1365
    %v1432 = vpop.permute.xlu0 %1431
    %1435 = vset.pattern.permute.xlu0 0
    %1436 = vperm.xlu0 %1435, %v1366
    %v1437 = vpop.permute.xlu0 %1436
    %1440 = vset.pattern.permute.xlu0 0
    %1441 = vperm.xlu0 %1440, %v1367
    %v1442 = vpop.permute.xlu0 %1441
    %1445 = vset.pattern.permute.xlu0 0
    %1446 = vperm.xlu0 %1445, %v1368
    %v1447 = vpop.permute.xlu0 %1446
    %v1449 = vmul.f32 %v1372, %v1337
    %v1450 = vmul.f32 %v1377, %v1338
    %v1451 = vmul.f32 %v1382, %v1339
    %v1452 = vmul.f32 %v1387, %v1340
    %v1453 = vmul.f32 %v1392, %v1341
    %v1454 = vmul.f32 %v1397, %v1342
    %v1455 = vmul.f32 %v1402, %v1343
    %v1456 = vmul.f32 %v1407, %v1344
    %v1457 = vmul.f32 %v1412, %v1345
    %v1458 = vmul.f32 %v1417, %v1346
    %v1459 = vmul.f32 %v1422, %v1347
    %v1460 = vmul.f32 %v1427, %v1348
    %v1461 = vmul.f32 %v1432, %v1349
    %v1462 = vmul.f32 %v1437, %v1350
    %v1463 = vmul.f32 %v1442, %v1351
    %v1464 = vmul.f32 %v1447, %v1352
    %v1465 = vadd.f32 %v1449, %v1450
    %v1466 = vadd.f32 %v1465, %v1451
    %v1467 = vadd.f32 %v1466, %v1452
    %v1468 = vadd.f32 %v1467, %v1453
    %v1469 = vadd.f32 %v1468, %v1454
    %v1470 = vadd.f32 %v1469, %v1455
    %v1471 = vadd.f32 %v1470, %v1456
    %v1472 = vadd.f32 %v1471, %v1457
    %v1473 = vadd.f32 %v1472, %v1458
    %v1474 = vadd.f32 %v1473, %v1459
    %v1475 = vadd.f32 %v1474, %v1460
    %v1476 = vadd.f32 %v1475, %v1461
    %v1477 = vadd.f32 %v1476, %v1462
    %v1478 = vadd.f32 %v1477, %v1463
    %v1479 = vadd.f32 %v1478, %v1464
    %v1480 = vrot.slane %v1479, 4
    %v1481 = vadd.f32 %v1479, %v1480
    %v1482 = vrot.slane %v1481, 2
    %v1483 = vadd.f32 %v1481, %v1482
    %v1484 = vrot.slane %v1483, 1
    %v1485 = vadd.f32 %v1483, %v1484
    %v1486 = vmul.f32 %v1485, 0.5
    %v1487 = vtanh.pop %v1486
    %v1488 = vadd.f32 %v1487, 1.0
    %v1489 = vmul.f32 %v1488, 0.5
    %1490 = vst [vmem:[#allocation2] sm:$0x1] %v1489
    // Predicated region
    $region42: #{tpu_custom_call.1} parent=1 // pred_check
      _
    $region43: #{tpu_custom_call.1} parent=1 // pred_check_branch
      %1492 = sbr.rel (0) target = $region45
    $region44: #{tpu_custom_call.1} parent=1 // pred_region
      %s1494 = ssub.s32 16, 16
      %1495 = vsyncadd [#allocation3], %s1494
      %s1497 = sshll.u32 [#allocation2], 4
      %s1498 = int_to_ptr.vmem [resolvable:$true] %s1497
      %1500 = dma.vmem_to_hbm [thread:$0]  %s1498, 16, %s10, [#allocation3]
    $region45: #{tpu_custom_call.1} parent=1 // pred_fallthru
      _
    // Predicated region
    $region46: #{tpu_custom_call.1} parent=1 // pred_check
      _
    $region47: #{tpu_custom_call.1} parent=1 // pred_check_branch
      %1502 = sbr.rel (0) target = $region49
    $region48: #{tpu_custom_call.1} parent=1 // pred_region
      %1503 = dma.done [#allocation3], 16
    $region49: #{tpu_custom_call.1} parent=1 // pred_fallthru
      _
    %1504 = vsyncpa [#allocation3], 1

</llo_original>
